<compile_context>
chip_gen: v6e
topology: v6e:2x2x1
jax: 0.10.0
libtpu: 0.0.40
codegen_flags: <defaults>
</compile_context>

<pallas_src>
import math

import jax
import jax.numpy as jnp
from jax.experimental import pallas as pl
from jax.experimental.pallas import tpu as pltpu

# Small, module-consistent sizes.
EMBED_DIM = 32          # "embedding_dim" (BERT hidden)
NUM_HEADS = 4
HEAD_DIM = EMBED_DIM // NUM_HEADS
INTERMEDIATE = 64
VOCAB = 64
SEQ_LEN = 8
BATCH = 2               # "batch_size"
TAGSET = 5              # "tagset_size"
LN_EPS = 1e-12
LANE = 128              # logits emitted lane-dense at this width, then sliced

_VMEM_SPEC = pl.BlockSpec(memory_space=pltpu.MemorySpace.VMEM)


def _offsets(fields):
    off, table = 0, {}
    for name, width in fields:
        table[name] = (off, off + width)
        off += width
    return table, off


# Slab A (bf16, EMBED_DIM rows): matmul weights, concatenated along columns.
_WH_FIELDS = [
    ('wqkv', 3 * EMBED_DIM), ('wo', EMBED_DIM), ('w1', INTERMEDIATE),
    ('wp', EMBED_DIM), ('wtag0', LANE), ('wtag1', LANE), ('wtag2', LANE),
]
_WH_OFF, _WH_COLS = _offsets(_WH_FIELDS)

# Slab B (f32, EMBED_DIM cols): embeddings, w2, padded head-selector constants.
_WV_FIELDS = [
    ('word_emb', VOCAB), ('pos_emb', SEQ_LEN), ('w2', INTERMEDIATE),
    ('sel', EMBED_DIM), ('sel_t', EMBED_DIM),
]
_WV_OFF, _WV_ROWS = _offsets(_WV_FIELDS)

# Slab C (f32, one row): all biases and LayerNorm params.
_B_FIELDS = [
    ('bqkv', 3 * EMBED_DIM), ('b1', INTERMEDIATE),
    ('embln_g', EMBED_DIM), ('embln_b', EMBED_DIM),
    ('bo', EMBED_DIM), ('ln1_g', EMBED_DIM), ('ln1_b', EMBED_DIM),
    ('b2', EMBED_DIM), ('ln2_g', EMBED_DIM), ('ln2_b', EMBED_DIM),
    ('bp', EMBED_DIM), ('b_tag', LANE),
]
_B_OFF, _B_COLS = _offsets(_B_FIELDS)


def _wh(ref, name):
    lo, hi = _WH_OFF[name]
    return ref[:, lo:hi]


def _wv(ref, name):
    lo, hi = _WV_OFF[name]
    return ref[lo:hi, :]


def _b(ref, name):
    lo, hi = _B_OFF[name]
    return ref[:, lo:hi]


def _layer_norm(x, gamma, beta):
    mean = jnp.mean(x, axis=-1, keepdims=True)
    var = jnp.mean((x - mean) ** 2, axis=-1, keepdims=True)
    return (x - mean) * jax.lax.rsqrt(var + LN_EPS) * gamma + beta


def fused_model_trans_kernel(ids_ref, mask_ref, wh_ref, wv_ref, b_ref,
                             logits_ref):
    """Three shared-weight encoder passes (stacked on batch) + classifier."""
    mask = mask_ref[...]                        # (N, S) float32 {0,1}, N = 3*B
    N, S = mask.shape
    H, HD = EMBED_DIM, HEAD_DIM
    NS = N * S

    # --- Embedding: one-hot token gather on the MXU + positional add + LN ---
    ids = ids_ref[...]                                          # (NS, 1) int32
    onehot = (ids == jax.lax.broadcasted_iota(jnp.int32, (NS, VOCAB), 1)
              ).astype(jnp.float32)                             # (NS, VOCAB)
    emb = jnp.dot(onehot, _wv(wv_ref, 'word_emb'),
                  preferred_element_type=jnp.float32)           # (NS, H)
    x = emb.reshape(N, S, H) + _wv(wv_ref, 'pos_emb')[None, :, :]
    x2 = _layer_norm(x.reshape(NS, H),
                     _b(b_ref, 'embln_g'), _b(b_ref, 'embln_b'))

    # --- Self-attention: fused QKV matmul; only the [CLS] query is needed
    #     (the module discards per-token outputs, keeps only pooled vectors) --
    qkv = (jnp.dot(x2.astype(jnp.bfloat16), _wh(wh_ref, 'wqkv'),
                   preferred_element_type=jnp.float32)
           + _b(b_ref, 'bqkv')).reshape(N, S, 3 * H)
    scale = 1.0 / math.sqrt(HD)
    q_cls = qkv[:, 0, :][:, 0:H] * scale                        # (N, H)
    k = qkv[:, :, H:2 * H]                                      # (N, S, H)
    v = qkv[:, :, 2 * H:3 * H]                                  # (N, S, H)

    # Host-baked head-selector constants (head axis zero-padded to H lanes)
    # turn the per-head contractions into plain 2-D MXU dots: no head loop,
    # no lane shuffles.  scores[n,s,h] = <q_cls[n,head h], k[n,s,head h]>.
    sel = _wv(wv_ref, 'sel')                                    # (H, H) f32
    sel_t = _wv(wv_ref, 'sel_t')                                # (H, H) f32

    prod = (q_cls[:, None, :] * k).reshape(NS, H)
    scores = jnp.dot(prod, sel,
                     preferred_element_type=jnp.float32).reshape(N, S, H)
    scores = scores + ((1.0 - mask) * (-1e9))[:, :, None]

    # Softmax over the key axis (axis=1); reciprocal on the EUP.
    m = jnp.max(scores, axis=1, keepdims=True)
    e = jnp.exp(scores - m)
    p = e * pl.reciprocal(jnp.sum(e, axis=1, keepdims=True), approx=True)

    # Padded head columns (NUM_HEADS..H-1) are killed by sel_t's zero rows.
    p_exp = jnp.dot(p.reshape(NS, H), sel_t,
                    preferred_element_type=jnp.float32).reshape(N, S, H)
    ctx = jnp.sum(p_exp * v, axis=1)                            # (N, H)

    # --- Post-attention path, [CLS] rows only ---
    attn_out = (jnp.dot(ctx.astype(jnp.bfloat16), _wh(wh_ref, 'wo'),
                        preferred_element_type=jnp.float32) + _b(b_ref, 'bo'))
    x_cls = x2.reshape(N, S, H)[:, 0, :]                        # (N, H)
    h1 = _layer_norm(x_cls + attn_out, _b(b_ref, 'ln1_g'), _b(b_ref, 'ln1_b'))

    # TODO(synk): HF BERT uses exact erf-GELU; tanh approximation kept here.
    ff = jax.nn.gelu(jnp.dot(h1.astype(jnp.bfloat16), _wh(wh_ref, 'w1'),
                             preferred_element_type=jnp.float32)
                     + _b(b_ref, 'b1'), approximate=True)
    ff = (jnp.dot(ff.astype(jnp.bfloat16),
                  _wv(wv_ref, 'w2').astype(jnp.bfloat16),
                  preferred_element_type=jnp.float32) + _b(b_ref, 'b2'))
    h2 = _layer_norm(h1 + ff, _b(b_ref, 'ln2_g'), _b(b_ref, 'ln2_b'))

    # Pooler: tanh(dense([CLS])).
    pooled = jnp.tanh(jnp.dot(h2.astype(jnp.bfloat16), _wh(wh_ref, 'wp'),
                              preferred_element_type=jnp.float32)
                      + _b(b_ref, 'bp'))                        # (N, H)

    # hidden2tag on concat([pooled1, pooled2, pooled3]) as a split matmul into
    # a lane-dense (B, 128) output (tag columns >= TAGSET are zero-padded).
    B = N // 3
    pooled3 = pooled.reshape(3, B, H).astype(jnp.bfloat16)
    logits = (jnp.dot(pooled3[0], _wh(wh_ref, 'wtag0'),
                      preferred_element_type=jnp.float32)
              + jnp.dot(pooled3[1], _wh(wh_ref, 'wtag1'),
                        preferred_element_type=jnp.float32)
              + jnp.dot(pooled3[2], _wh(wh_ref, 'wtag2'),
                        preferred_element_type=jnp.float32)
              + _b(b_ref, 'b_tag'))
    logits_ref[...] = logits


def init_params(key):
    ks = jax.random.split(key, 12)

    def w(k, shape):
        return (0.02 * jax.random.normal(k, shape)).astype(jnp.float32)

    H, I, T = EMBED_DIM, INTERMEDIATE, TAGSET
    ones = lambda n: jnp.ones((1, n), jnp.float32)
    zeros = lambda n: jnp.zeros((1, n), jnp.float32)
    return {
        # embeddings
        'word_emb': w(ks[0], (VOCAB, H)),
        'pos_emb': w(ks[1], (SEQ_LEN, H)),
        # encoder layer (shared across the three calls)
        'embln_g': ones(H), 'embln_b': zeros(H),
        'wq': w(ks[2], (H, H)), 'bq': zeros(H),
        'wk': w(ks[3], (H, H)), 'bk': zeros(H),
        'wv': w(ks[4], (H, H)), 'bv': zeros(H),
        'wo': w(ks[5], (H, H)), 'bo': zeros(H),
        'ln1_g': ones(H), 'ln1_b': zeros(H),
        'w1': w(ks[6], (H, I)), 'b1': zeros(I),
        'w2': w(ks[7], (I, H)), 'b2': zeros(H),
        'ln2_g': ones(H), 'ln2_b': zeros(H),
        'wp': w(ks[8], (H, H)), 'bp': zeros(H),
        # hidden2tag: Linear(embedding_dim * 3, tagset_size)
        'w_tag': w(ks[9], (3 * H, T)), 'b_tag': zeros(T),
    }


def pack_params(params):
    """Pack the ~20 tiny tensors into 3 slabs (done once, outside the kernel)."""
    H = EMBED_DIM

    def pad_cols(a, width):
        return jnp.pad(a, ((0, 0), (0, width - a.shape[1])))

    # bf16 weight slab (H rows).
    wqkv = jnp.concatenate([params['wq'], params['wk'], params['wv']], axis=1)
    wtag = params['w_tag']                                      # (3H, T)
    wh_parts = {
        'wqkv': wqkv, 'wo': params['wo'], 'w1': params['w1'],
        'wp': params['wp'],
        'wtag0': pad_cols(wtag[0:H, :], LANE),
        'wtag1': pad_cols(wtag[H:2 * H, :], LANE),
        'wtag2': pad_cols(wtag[2 * H:3 * H, :], LANE),
    }
    wslab_h = jnp.concatenate([wh_parts[n] for n, _ in _WH_FIELDS],
                              axis=1).astype(jnp.bfloat16)

    # f32 slab (H cols): embeddings, w2, padded head-selector constants.
    sel = jnp.repeat(jnp.eye(NUM_HEADS, dtype=jnp.float32), HEAD_DIM, axis=0)
    sel_pad = jnp.pad(sel, ((0, 0), (0, H - NUM_HEADS)))        # (H, H)
    wv_parts = {
        'word_emb': params['word_emb'], 'pos_emb': params['pos_emb'],
        'w2': params['w2'], 'sel': sel_pad, 'sel_t': sel_pad.T,
    }
    wslab_v = jnp.concatenate([wv_parts[n] for n, _ in _WV_FIELDS],
                              axis=0).astype(jnp.float32)

    # f32 bias / LayerNorm slab (1 row).
    bqkv = jnp.concatenate([params['bq'], params['bk'], params['bv']], axis=1)
    b_parts = {
        'bqkv': bqkv, 'b1': params['b1'],
        'embln_g': params['embln_g'], 'embln_b': params['embln_b'],
        'bo': params['bo'], 'ln1_g': params['ln1_g'], 'ln1_b': params['ln1_b'],
        'b2': params['b2'], 'ln2_g': params['ln2_g'], 'ln2_b': params['ln2_b'],
        'bp': params['bp'], 'b_tag': pad_cols(params['b_tag'], LANE),
    }
    bslab = jnp.concatenate([b_parts[n] for n, _ in _B_FIELDS],
                            axis=1).astype(jnp.float32)

    assert wslab_h.shape == (H, _WH_COLS)
    assert wslab_v.shape == (_WV_ROWS, H)
    assert bslab.shape == (1, _B_COLS)
    return {'wslab_h': wslab_h, 'wslab_v': wslab_v, 'bslab': bslab}


def model_trans_forward(packed, ids1, ids2, ids3, mask1, mask2, mask3):
    B, S = ids1.shape
    # Stack the three inputs along batch -> one fused kernel invocation.
    ids = jnp.concatenate([ids1, ids2, ids3], axis=0).astype(jnp.int32)  # (3B,S)
    ids2d = ids.reshape(3 * B * S, 1)          # lane-broadcast form for one-hot
    masks = jnp.concatenate([mask1, mask2, mask3], axis=0).astype(jnp.float32)

    logits_pad = pl.pallas_call(
        fused_model_trans_kernel,
        out_shape=jax.ShapeDtypeStruct((B, LANE), jnp.float32),
        in_specs=[_VMEM_SPEC] * 5,
        out_specs=_VMEM_SPEC,
    )(ids2d, masks, packed['wslab_h'], packed['wslab_v'], packed['bslab'])
    return logits_pad[:, :TAGSET]


if __name__ == "__main__":
    key = jax.random.PRNGKey(0)
    pkey, dkey = jax.random.split(key)
    params = init_params(pkey)
    packed = pack_params(params)               # slab packing done once

    k1, k2, k3 = jax.random.split(dkey, 3)
    ids1 = jax.random.randint(k1, (BATCH, SEQ_LEN), 0, VOCAB, dtype=jnp.int32)
    ids2 = jax.random.randint(k2, (BATCH, SEQ_LEN), 0, VOCAB, dtype=jnp.int32)
    ids3 = jax.random.randint(k3, (BATCH, SEQ_LEN), 0, VOCAB, dtype=jnp.int32)
    mask = jnp.ones((BATCH, SEQ_LEN), jnp.float32)

    logits = jax.jit(model_trans_forward)(packed, ids1, ids2, ids3,
                                          mask, mask, mask)
    jax.block_until_ready(logits)
    assert logits.shape == (BATCH, TAGSET) and logits.dtype == jnp.float32
    print("KERNEL_OK")
</pallas_src>

<mosaic_0001>
module attributes {stable_mosaic.version = 11 : i64} {
  func.func @fused_model_trans_kernel(%arg0: memref<48x1xi32, #tpu.memory_space<vmem>>, %arg1: memref<6x8xf32, #tpu.memory_space<vmem>>, %arg2: memref<32x608xbf16, #tpu.memory_space<vmem>>, %arg3: memref<200x32xf32, #tpu.memory_space<vmem>>, %arg4: memref<1x576xf32, #tpu.memory_space<vmem>>, %arg5: memref<2x128xf32, #tpu.memory_space<vmem>>) attributes {dimension_semantics = [], scalar_prefetch = 0 : i64, scratch_operands = 0 : i64, tpu.core_type = #tpu.core_type<tc>} {
    %c0 = arith.constant 0 : index
    %c0_0 = arith.constant 0 : index
    %0 = vector.load %arg1[%c0, %c0_0] : memref<6x8xf32, #tpu.memory_space<vmem>>, vector<6x8xf32>
    %c0_1 = arith.constant 0 : index
    %c0_2 = arith.constant 0 : index
    %1 = vector.load %arg0[%c0_1, %c0_2] : memref<48x1xi32, #tpu.memory_space<vmem>>, vector<48x1xi32>
    %2 = tpu.iota {dimensions = array<i32: 1>} : vector<48x64xi32>
    %3 = vector.broadcast %1 : vector<48x1xi32> to vector<48x64xi32>
    %4 = arith.cmpi eq, %3, %2 : vector<48x64xi32>
    %5 = arith.extui %4 : vector<48x64xi1> to vector<48x64xi32>
    %6 = arith.sitofp %5 : vector<48x64xi32> to vector<48x64xf32>
    %c0_3 = arith.constant 0 : index
    %c0_4 = arith.constant 0 : index
    %7 = vector.load %arg3[%c0_3, %c0_4] : memref<200x32xf32, #tpu.memory_space<vmem>>, vector<64x32xf32>
    %cst = arith.constant dense<0.000000e+00> : vector<48x32xf32>
    %8 = tpu.matmul %6, %7, %cst {dimension_numbers = #tpu.dot_dimension_numbers<[1], [0], [0], [1], [0, 0, 1, 1], [], []>} : vector<48x64xf32>, vector<64x32xf32>, vector<48x32xf32> -> vector<48x32xf32>
    %9 = vector.shape_cast %8 : vector<48x32xf32> to vector<6x8x32xf32>
    %c64 = arith.constant 64 : index
    %c0_5 = arith.constant 0 : index
    %10 = vector.load %arg3[%c64, %c0_5] : memref<200x32xf32, #tpu.memory_space<vmem>>, vector<8x32xf32>
    %11 = vector.shape_cast %10 : vector<8x32xf32> to vector<1x8x32xf32>
    %12 = vector.broadcast %11 : vector<1x8x32xf32> to vector<6x8x32xf32>
    %13 = arith.addf %9, %12 : vector<6x8x32xf32>
    %14 = vector.shape_cast %13 : vector<6x8x32xf32> to vector<48x32xf32>
    %c0_6 = arith.constant 0 : index
    %c160 = arith.constant 160 : index
    %15 = vector.load %arg4[%c0_6, %c160] : memref<1x576xf32, #tpu.memory_space<vmem>>, vector<1x32xf32>
    %c0_7 = arith.constant 0 : index
    %c192 = arith.constant 192 : index
    %16 = vector.load %arg4[%c0_7, %c192] : memref<1x576xf32, #tpu.memory_space<vmem>>, vector<1x32xf32>
    %cst_8 = arith.constant dense<0.000000e+00> : vector<48xf32>
    %17 = vector.multi_reduction <add>, %14, %cst_8 [1] : vector<48x32xf32> to vector<48xf32>
    %18 = vector.shape_cast %17 : vector<48xf32> to vector<48x1xf32>
    %cst_9 = arith.constant 3.200000e+01 : f32
    %19 = vector.broadcast %cst_9 : f32 to vector<48x1xf32>
    %20 = arith.divf %18, %19 : vector<48x1xf32>
    %21 = vector.broadcast %20 : vector<48x1xf32> to vector<48x32xf32>
    %22 = arith.subf %14, %21 : vector<48x32xf32>
    %23 = arith.mulf %22, %22 : vector<48x32xf32>
    %cst_10 = arith.constant dense<0.000000e+00> : vector<48xf32>
    %24 = vector.multi_reduction <add>, %23, %cst_10 [1] : vector<48x32xf32> to vector<48xf32>
    %25 = vector.shape_cast %24 : vector<48xf32> to vector<48x1xf32>
    %cst_11 = arith.constant 3.200000e+01 : f32
    %26 = vector.broadcast %cst_11 : f32 to vector<48x1xf32>
    %27 = arith.divf %25, %26 : vector<48x1xf32>
    %28 = vector.broadcast %20 : vector<48x1xf32> to vector<48x32xf32>
    %29 = arith.subf %14, %28 : vector<48x32xf32>
    %cst_12 = arith.constant 9.99999996E-13 : f32
    %30 = vector.broadcast %cst_12 : f32 to vector<48x1xf32>
    %31 = arith.addf %27, %30 : vector<48x1xf32>
    %32 = math.rsqrt %31 : vector<48x1xf32>
    %33 = vector.broadcast %32 : vector<48x1xf32> to vector<48x32xf32>
    %34 = arith.mulf %29, %33 : vector<48x32xf32>
    %35 = vector.broadcast %15 : vector<1x32xf32> to vector<48x32xf32>
    %36 = arith.mulf %34, %35 : vector<48x32xf32>
    %37 = vector.broadcast %16 : vector<1x32xf32> to vector<48x32xf32>
    %38 = arith.addf %36, %37 : vector<48x32xf32>
    %39 = arith.truncf %38 : vector<48x32xf32> to vector<48x32xbf16>
    %c0_13 = arith.constant 0 : index
    %c0_14 = arith.constant 0 : index
    %40 = vector.load %arg2[%c0_13, %c0_14] : memref<32x608xbf16, #tpu.memory_space<vmem>>, vector<32x96xbf16>
    %cst_15 = arith.constant dense<0.000000e+00> : vector<48x96xf32>
    %41 = tpu.matmul %39, %40, %cst_15 {dimension_numbers = #tpu.dot_dimension_numbers<[1], [0], [0], [1], [0, 0, 1, 1], [], []>} : vector<48x32xbf16>, vector<32x96xbf16>, vector<48x96xf32> -> vector<48x96xf32>
    %c0_16 = arith.constant 0 : index
    %c0_17 = arith.constant 0 : index
    %42 = vector.load %arg4[%c0_16, %c0_17] : memref<1x576xf32, #tpu.memory_space<vmem>>, vector<1x96xf32>
    %43 = vector.broadcast %42 : vector<1x96xf32> to vector<48x96xf32>
    %44 = arith.addf %41, %43 : vector<48x96xf32>
    %45 = vector.shape_cast %44 : vector<48x96xf32> to vector<6x8x96xf32>
    %46 = vector.extract_strided_slice %45 {offsets = [0, 0, 0], sizes = [6, 1, 96], strides = [1, 1, 1]} : vector<6x8x96xf32> to vector<6x1x96xf32>
    %47 = vector.shape_cast %46 : vector<6x1x96xf32> to vector<6x96xf32>
    %48 = vector.extract_strided_slice %47 {offsets = [0, 0], sizes = [6, 32], strides = [1, 1]} : vector<6x96xf32> to vector<6x32xf32>
    %cst_18 = arith.constant 0.353553385 : f32
    %49 = vector.broadcast %cst_18 : f32 to vector<6x32xf32>
    %50 = arith.mulf %48, %49 : vector<6x32xf32>
    %51 = vector.extract_strided_slice %45 {offsets = [0, 0, 32], sizes = [6, 8, 32], strides = [1, 1, 1]} : vector<6x8x96xf32> to vector<6x8x32xf32>
    %52 = vector.extract_strided_slice %45 {offsets = [0, 0, 64], sizes = [6, 8, 32], strides = [1, 1, 1]} : vector<6x8x96xf32> to vector<6x8x32xf32>
    %c136 = arith.constant 136 : index
    %c0_19 = arith.constant 0 : index
    %53 = vector.load %arg3[%c136, %c0_19] : memref<200x32xf32, #tpu.memory_space<vmem>>, vector<32x32xf32>
    %c168 = arith.constant 168 : index
    %c0_20 = arith.constant 0 : index
    %54 = vector.load %arg3[%c168, %c0_20] : memref<200x32xf32, #tpu.memory_space<vmem>>, vector<32x32xf32>
    %55 = vector.shape_cast %50 : vector<6x32xf32> to vector<6x1x32xf32>
    %56 = vector.broadcast %55 : vector<6x1x32xf32> to vector<6x8x32xf32>
    %57 = arith.mulf %56, %51 : vector<6x8x32xf32>
    %58 = vector.shape_cast %57 : vector<6x8x32xf32> to vector<48x32xf32>
    %cst_21 = arith.constant dense<0.000000e+00> : vector<48x32xf32>
    %59 = tpu.matmul %58, %53, %cst_21 {dimension_numbers = #tpu.dot_dimension_numbers<[1], [0], [0], [1], [0, 0, 1, 1], [], []>} : vector<48x32xf32>, vector<32x32xf32>, vector<48x32xf32> -> vector<48x32xf32>
    %60 = vector.shape_cast %59 : vector<48x32xf32> to vector<6x8x32xf32>
    %cst_22 = arith.constant 1.000000e+00 : f32
    %61 = vector.broadcast %cst_22 : f32 to vector<6x8xf32>
    %62 = arith.subf %61, %0 : vector<6x8xf32>
    %cst_23 = arith.constant -1.000000e+09 : f32
    %63 = vector.broadcast %cst_23 : f32 to vector<6x8xf32>
    %64 = arith.mulf %62, %63 : vector<6x8xf32>
    %65 = vector.shape_cast %64 : vector<6x8xf32> to vector<6x8x1xf32>
    %66 = vector.broadcast %65 : vector<6x8x1xf32> to vector<6x8x32xf32>
    %67 = arith.addf %60, %66 : vector<6x8x32xf32>
    %cst_24 = arith.constant dense<0xFF800000> : vector<6x32xf32>
    %68 = vector.multi_reduction <maximumf>, %67, %cst_24 [1] : vector<6x8x32xf32> to vector<6x32xf32>
    %69 = vector.shape_cast %68 : vector<6x32xf32> to vector<6x1x32xf32>
    %70 = vector.broadcast %69 : vector<6x1x32xf32> to vector<6x8x32xf32>
    %71 = arith.subf %67, %70 : vector<6x8x32xf32>
    %72 = math.exp %71 : vector<6x8x32xf32>
    %cst_25 = arith.constant dense<0.000000e+00> : vector<6x32xf32>
    %73 = vector.multi_reduction <add>, %72, %cst_25 [1] : vector<6x8x32xf32> to vector<6x32xf32>
    %74 = vector.shape_cast %73 : vector<6x32xf32> to vector<6x1x32xf32>
    %75 = tpu.reciprocal %74 {approx = true} : vector<6x1x32xf32> -> vector<6x1x32xf32>
    %76 = vector.broadcast %75 : vector<6x1x32xf32> to vector<6x8x32xf32>
    %77 = arith.mulf %72, %76 : vector<6x8x32xf32>
    %78 = vector.shape_cast %77 : vector<6x8x32xf32> to vector<48x32xf32>
    %cst_26 = arith.constant dense<0.000000e+00> : vector<48x32xf32>
    %79 = tpu.matmul %78, %54, %cst_26 {dimension_numbers = #tpu.dot_dimension_numbers<[1], [0], [0], [1], [0, 0, 1, 1], [], []>} : vector<48x32xf32>, vector<32x32xf32>, vector<48x32xf32> -> vector<48x32xf32>
    %80 = vector.shape_cast %79 : vector<48x32xf32> to vector<6x8x32xf32>
    %81 = arith.mulf %80, %52 : vector<6x8x32xf32>
    %cst_27 = arith.constant dense<0.000000e+00> : vector<6x32xf32>
    %82 = vector.multi_reduction <add>, %81, %cst_27 [1] : vector<6x8x32xf32> to vector<6x32xf32>
    %83 = arith.truncf %82 : vector<6x32xf32> to vector<6x32xbf16>
    %c0_28 = arith.constant 0 : index
    %c96 = arith.constant 96 : index
    %84 = vector.load %arg2[%c0_28, %c96] : memref<32x608xbf16, #tpu.memory_space<vmem>>, vector<32x32xbf16>
    %cst_29 = arith.constant dense<0.000000e+00> : vector<6x32xf32>
    %85 = tpu.matmul %83, %84, %cst_29 {dimension_numbers = #tpu.dot_dimension_numbers<[1], [0], [0], [1], [0, 0, 1, 1], [], []>} : vector<6x32xbf16>, vector<32x32xbf16>, vector<6x32xf32> -> vector<6x32xf32>
    %c0_30 = arith.constant 0 : index
    %c224 = arith.constant 224 : index
    %86 = vector.load %arg4[%c0_30, %c224] : memref<1x576xf32, #tpu.memory_space<vmem>>, vector<1x32xf32>
    %87 = vector.broadcast %86 : vector<1x32xf32> to vector<6x32xf32>
    %88 = arith.addf %85, %87 : vector<6x32xf32>
    %89 = vector.shape_cast %38 : vector<48x32xf32> to vector<6x8x32xf32>
    %90 = vector.extract_strided_slice %89 {offsets = [0, 0, 0], sizes = [6, 1, 32], strides = [1, 1, 1]} : vector<6x8x32xf32> to vector<6x1x32xf32>
    %91 = vector.shape_cast %90 : vector<6x1x32xf32> to vector<6x32xf32>
    %92 = arith.addf %91, %88 : vector<6x32xf32>
    %c0_31 = arith.constant 0 : index
    %c256 = arith.constant 256 : index
    %93 = vector.load %arg4[%c0_31, %c256] : memref<1x576xf32, #tpu.memory_space<vmem>>, vector<1x32xf32>
    %c0_32 = arith.constant 0 : index
    %c288 = arith.constant 288 : index
    %94 = vector.load %arg4[%c0_32, %c288] : memref<1x576xf32, #tpu.memory_space<vmem>>, vector<1x32xf32>
    %cst_33 = arith.constant dense<0.000000e+00> : vector<6xf32>
    %95 = vector.multi_reduction <add>, %92, %cst_33 [1] : vector<6x32xf32> to vector<6xf32>
    %96 = vector.shape_cast %95 : vector<6xf32> to vector<6x1xf32>
    %cst_34 = arith.constant 3.200000e+01 : f32
    %97 = vector.broadcast %cst_34 : f32 to vector<6x1xf32>
    %98 = arith.divf %96, %97 : vector<6x1xf32>
    %99 = vector.broadcast %98 : vector<6x1xf32> to vector<6x32xf32>
    %100 = arith.subf %92, %99 : vector<6x32xf32>
    %101 = arith.mulf %100, %100 : vector<6x32xf32>
    %cst_35 = arith.constant dense<0.000000e+00> : vector<6xf32>
    %102 = vector.multi_reduction <add>, %101, %cst_35 [1] : vector<6x32xf32> to vector<6xf32>
    %103 = vector.shape_cast %102 : vector<6xf32> to vector<6x1xf32>
    %cst_36 = arith.constant 3.200000e+01 : f32
    %104 = vector.broadcast %cst_36 : f32 to vector<6x1xf32>
    %105 = arith.divf %103, %104 : vector<6x1xf32>
    %106 = vector.broadcast %98 : vector<6x1xf32> to vector<6x32xf32>
    %107 = arith.subf %92, %106 : vector<6x32xf32>
    %cst_37 = arith.constant 9.99999996E-13 : f32
    %108 = vector.broadcast %cst_37 : f32 to vector<6x1xf32>
    %109 = arith.addf %105, %108 : vector<6x1xf32>
    %110 = math.rsqrt %109 : vector<6x1xf32>
    %111 = vector.broadcast %110 : vector<6x1xf32> to vector<6x32xf32>
    %112 = arith.mulf %107, %111 : vector<6x32xf32>
    %113 = vector.broadcast %93 : vector<1x32xf32> to vector<6x32xf32>
    %114 = arith.mulf %112, %113 : vector<6x32xf32>
    %115 = vector.broadcast %94 : vector<1x32xf32> to vector<6x32xf32>
    %116 = arith.addf %114, %115 : vector<6x32xf32>
    %117 = arith.truncf %116 : vector<6x32xf32> to vector<6x32xbf16>
    %c0_38 = arith.constant 0 : index
    %c128 = arith.constant 128 : index
    %118 = vector.load %arg2[%c0_38, %c128] : memref<32x608xbf16, #tpu.memory_space<vmem>>, vector<32x64xbf16>
    %cst_39 = arith.constant dense<0.000000e+00> : vector<6x64xf32>
    %119 = tpu.matmul %117, %118, %cst_39 {dimension_numbers = #tpu.dot_dimension_numbers<[1], [0], [0], [1], [0, 0, 1, 1], [], []>} : vector<6x32xbf16>, vector<32x64xbf16>, vector<6x64xf32> -> vector<6x64xf32>
    %c0_40 = arith.constant 0 : index
    %c96_41 = arith.constant 96 : index
    %120 = vector.load %arg4[%c0_40, %c96_41] : memref<1x576xf32, #tpu.memory_space<vmem>>, vector<1x64xf32>
    %121 = vector.broadcast %120 : vector<1x64xf32> to vector<6x64xf32>
    %122 = arith.addf %119, %121 : vector<6x64xf32>
    %123 = arith.mulf %122, %122 : vector<6x64xf32>
    %124 = arith.mulf %122, %123 : vector<6x64xf32>
    %cst_42 = arith.constant 4.471500e-02 : f32
    %125 = vector.broadcast %cst_42 : f32 to vector<6x64xf32>
    %126 = arith.mulf %125, %124 : vector<6x64xf32>
    %127 = arith.addf %122, %126 : vector<6x64xf32>
    %cst_43 = arith.constant 0.797884583 : f32
    %128 = vector.broadcast %cst_43 : f32 to vector<6x64xf32>
    %129 = arith.mulf %128, %127 : vector<6x64xf32>
    %130 = math.tanh %129 : vector<6x64xf32>
    %cst_44 = arith.constant 1.000000e+00 : f32
    %131 = vector.broadcast %cst_44 : f32 to vector<6x64xf32>
    %132 = arith.addf %131, %130 : vector<6x64xf32>
    %cst_45 = arith.constant 5.000000e-01 : f32
    %133 = vector.broadcast %cst_45 : f32 to vector<6x64xf32>
    %134 = arith.mulf %133, %132 : vector<6x64xf32>
    %135 = arith.mulf %122, %134 : vector<6x64xf32>
    %136 = arith.truncf %135 : vector<6x64xf32> to vector<6x64xbf16>
    %c72 = arith.constant 72 : index
    %c0_46 = arith.constant 0 : index
    %137 = vector.load %arg3[%c72, %c0_46] : memref<200x32xf32, #tpu.memory_space<vmem>>, vector<64x32xf32>
    %138 = arith.truncf %137 : vector<64x32xf32> to vector<64x32xbf16>
    %cst_47 = arith.constant dense<0.000000e+00> : vector<6x32xf32>
    %139 = tpu.matmul %136, %138, %cst_47 {dimension_numbers = #tpu.dot_dimension_numbers<[1], [0], [0], [1], [0, 0, 1, 1], [], []>} : vector<6x64xbf16>, vector<64x32xbf16>, vector<6x32xf32> -> vector<6x32xf32>
    %c0_48 = arith.constant 0 : index
    %c320 = arith.constant 320 : index
    %140 = vector.load %arg4[%c0_48, %c320] : memref<1x576xf32, #tpu.memory_space<vmem>>, vector<1x32xf32>
    %141 = vector.broadcast %140 : vector<1x32xf32> to vector<6x32xf32>
    %142 = arith.addf %139, %141 : vector<6x32xf32>
    %143 = arith.addf %116, %142 : vector<6x32xf32>
    %c0_49 = arith.constant 0 : index
    %c352 = arith.constant 352 : index
    %144 = vector.load %arg4[%c0_49, %c352] : memref<1x576xf32, #tpu.memory_space<vmem>>, vector<1x32xf32>
    %c0_50 = arith.constant 0 : index
    %c384 = arith.constant 384 : index
    %145 = vector.load %arg4[%c0_50, %c384] : memref<1x576xf32, #tpu.memory_space<vmem>>, vector<1x32xf32>
    %cst_51 = arith.constant dense<0.000000e+00> : vector<6xf32>
    %146 = vector.multi_reduction <add>, %143, %cst_51 [1] : vector<6x32xf32> to vector<6xf32>
    %147 = vector.shape_cast %146 : vector<6xf32> to vector<6x1xf32>
    %cst_52 = arith.constant 3.200000e+01 : f32
    %148 = vector.broadcast %cst_52 : f32 to vector<6x1xf32>
    %149 = arith.divf %147, %148 : vector<6x1xf32>
    %150 = vector.broadcast %149 : vector<6x1xf32> to vector<6x32xf32>
    %151 = arith.subf %143, %150 : vector<6x32xf32>
    %152 = arith.mulf %151, %151 : vector<6x32xf32>
    %cst_53 = arith.constant dense<0.000000e+00> : vector<6xf32>
    %153 = vector.multi_reduction <add>, %152, %cst_53 [1] : vector<6x32xf32> to vector<6xf32>
    %154 = vector.shape_cast %153 : vector<6xf32> to vector<6x1xf32>
    %cst_54 = arith.constant 3.200000e+01 : f32
    %155 = vector.broadcast %cst_54 : f32 to vector<6x1xf32>
    %156 = arith.divf %154, %155 : vector<6x1xf32>
    %157 = vector.broadcast %149 : vector<6x1xf32> to vector<6x32xf32>
    %158 = arith.subf %143, %157 : vector<6x32xf32>
    %cst_55 = arith.constant 9.99999996E-13 : f32
    %159 = vector.broadcast %cst_55 : f32 to vector<6x1xf32>
    %160 = arith.addf %156, %159 : vector<6x1xf32>
    %161 = math.rsqrt %160 : vector<6x1xf32>
    %162 = vector.broadcast %161 : vector<6x1xf32> to vector<6x32xf32>
    %163 = arith.mulf %158, %162 : vector<6x32xf32>
    %164 = vector.broadcast %144 : vector<1x32xf32> to vector<6x32xf32>
    %165 = arith.mulf %163, %164 : vector<6x32xf32>
    %166 = vector.broadcast %145 : vector<1x32xf32> to vector<6x32xf32>
    %167 = arith.addf %165, %166 : vector<6x32xf32>
    %168 = arith.truncf %167 : vector<6x32xf32> to vector<6x32xbf16>
    %c0_56 = arith.constant 0 : index
    %c192_57 = arith.constant 192 : index
    %169 = vector.load %arg2[%c0_56, %c192_57] : memref<32x608xbf16, #tpu.memory_space<vmem>>, vector<32x32xbf16>
    %cst_58 = arith.constant dense<0.000000e+00> : vector<6x32xf32>
    %170 = tpu.matmul %168, %169, %cst_58 {dimension_numbers = #tpu.dot_dimension_numbers<[1], [0], [0], [1], [0, 0, 1, 1], [], []>} : vector<6x32xbf16>, vector<32x32xbf16>, vector<6x32xf32> -> vector<6x32xf32>
    %c0_59 = arith.constant 0 : index
    %c416 = arith.constant 416 : index
    %171 = vector.load %arg4[%c0_59, %c416] : memref<1x576xf32, #tpu.memory_space<vmem>>, vector<1x32xf32>
    %172 = vector.broadcast %171 : vector<1x32xf32> to vector<6x32xf32>
    %173 = arith.addf %170, %172 : vector<6x32xf32>
    %174 = math.tanh %173 : vector<6x32xf32>
    %175 = vector.shape_cast %174 : vector<6x32xf32> to vector<3x2x32xf32>
    %176 = arith.truncf %175 : vector<3x2x32xf32> to vector<3x2x32xbf16>
    %177 = vector.extract_strided_slice %176 {offsets = [0, 0, 0], sizes = [1, 2, 32], strides = [1, 1, 1]} : vector<3x2x32xbf16> to vector<1x2x32xbf16>
    %178 = vector.shape_cast %177 : vector<1x2x32xbf16> to vector<2x32xbf16>
    %c0_60 = arith.constant 0 : index
    %c224_61 = arith.constant 224 : index
    %179 = vector.load %arg2[%c0_60, %c224_61] : memref<32x608xbf16, #tpu.memory_space<vmem>>, vector<32x128xbf16>
    %cst_62 = arith.constant dense<0.000000e+00> : vector<2x128xf32>
    %180 = tpu.matmul %178, %179, %cst_62 {dimension_numbers = #tpu.dot_dimension_numbers<[1], [0], [0], [1], [0, 0, 1, 1], [], []>} : vector<2x32xbf16>, vector<32x128xbf16>, vector<2x128xf32> -> vector<2x128xf32>
    %181 = vector.extract_strided_slice %176 {offsets = [1, 0, 0], sizes = [1, 2, 32], strides = [1, 1, 1]} : vector<3x2x32xbf16> to vector<1x2x32xbf16>
    %182 = vector.shape_cast %181 : vector<1x2x32xbf16> to vector<2x32xbf16>
    %c0_63 = arith.constant 0 : index
    %c352_64 = arith.constant 352 : index
    %183 = vector.load %arg2[%c0_63, %c352_64] : memref<32x608xbf16, #tpu.memory_space<vmem>>, vector<32x128xbf16>
    %cst_65 = arith.constant dense<0.000000e+00> : vector<2x128xf32>
    %184 = tpu.matmul %182, %183, %cst_65 {dimension_numbers = #tpu.dot_dimension_numbers<[1], [0], [0], [1], [0, 0, 1, 1], [], []>} : vector<2x32xbf16>, vector<32x128xbf16>, vector<2x128xf32> -> vector<2x128xf32>
    %185 = arith.addf %180, %184 : vector<2x128xf32>
    %186 = vector.extract_strided_slice %176 {offsets = [2, 0, 0], sizes = [1, 2, 32], strides = [1, 1, 1]} : vector<3x2x32xbf16> to vector<1x2x32xbf16>
    %187 = vector.shape_cast %186 : vector<1x2x32xbf16> to vector<2x32xbf16>
    %c0_66 = arith.constant 0 : index
    %c480 = arith.constant 480 : index
    %188 = vector.load %arg2[%c0_66, %c480] : memref<32x608xbf16, #tpu.memory_space<vmem>>, vector<32x128xbf16>
    %cst_67 = arith.constant dense<0.000000e+00> : vector<2x128xf32>
    %189 = tpu.matmul %187, %188, %cst_67 {dimension_numbers = #tpu.dot_dimension_numbers<[1], [0], [0], [1], [0, 0, 1, 1], [], []>} : vector<2x32xbf16>, vector<32x128xbf16>, vector<2x128xf32> -> vector<2x128xf32>
    %190 = arith.addf %185, %189 : vector<2x128xf32>
    %c0_68 = arith.constant 0 : index
    %c448 = arith.constant 448 : index
    %191 = vector.load %arg4[%c0_68, %c448] : memref<1x576xf32, #tpu.memory_space<vmem>>, vector<1x128xf32>
    %192 = vector.broadcast %191 : vector<1x128xf32> to vector<2x128xf32>
    %193 = arith.addf %190, %192 : vector<2x128xf32>
    %c0_69 = arith.constant 0 : index
    %c0_70 = arith.constant 0 : index
    %194 = vector.load %arg5[%c0_69, %c0_70] : memref<2x128xf32, #tpu.memory_space<vmem>>, vector<2x128xf32>
    tpu.vector_store %arg5[%c0_69, %c0_70], %193 {strides = array<i32>} : memref<2x128xf32, #tpu.memory_space<vmem>>, vector<2x128xf32>,
    return
  }
}

</mosaic_0001>

<llo_original>
// kernel: model_trans_forward.1
$region0: #{model_trans_forward.1}
  #allocation0 [shape = 'u32[]', space=smem, size = 0x4, offset = 0x4, fixed_abs, tag = 'smem constant byte address 0x4 - core index']
  #allocation1 [shape = 'u32[144,128]{1,0:T(1,128)}', space=vmem, size = 0x12000, scoped, tag = 'internal scratch']
  %s0 = inlined_call_operand.vmem [shape: s32[48,1], index: 0, kind: input, shape index: {}]
  %s1 = inlined_call_operand.vmem [shape: f32[6,8], index: 1, kind: input, shape index: {}]
  %s2 = inlined_call_operand.vmem [shape: bf16[32,608], index: 2, kind: input, shape index: {}]
  %s3 = inlined_call_operand.vmem [shape: f32[200,32], index: 3, kind: input, shape index: {}]
  %s4 = inlined_call_operand.vmem [shape: f32[1,576], index: 4, kind: input, shape index: {}]
  %s5 = inlined_call_operand.hbm [shape: f32[2,128], index: 5, kind: output, shape index: {}]
  %s6 = sld [smem:[#allocation0]]
  $region30: #{model_trans_forward.1} parent=0
    _
  %s8 = ssub.s32 1, %s6
  %s9 = scalar_select 0, %s8, %s6
  $region1: #{model_trans_forward.1} parent=0
    #allocation2 [shape = 'u8[1024]{0}', space=vmem, size = 0x400, scoped, tag = 'output window, operand 0, single buffered']
    #allocation3 [shape = 's32[1]{0}', space=sflag, size = 0x4, scoped, tag = 'scoped memory for model_trans_forward.1']
    %10 = vsyncpa [#allocation3], 0
    // Predicated region
    $region2: #{model_trans_forward.1} parent=1 // pred_check
      _
    $region3: #{model_trans_forward.1} parent=1 // pred_check_branch
      %12 = sbr.rel (0) target = $region5
    $region4: #{model_trans_forward.1} parent=1 // pred_region
      _
    $region5: #{model_trans_forward.1} parent=1 // pred_fallthru
      _
    // Predicated region
    $region6: #{model_trans_forward.1} parent=1 // pred_check
      _
    $region7: #{model_trans_forward.1} parent=1 // pred_check_branch
      %14 = sbr.rel (0) target = $region9
    $region8: #{model_trans_forward.1} parent=1 // pred_region
      _
    $region9: #{model_trans_forward.1} parent=1 // pred_fallthru
      _
    // Predicated region
    $region10: #{model_trans_forward.1} parent=1 // pred_check
      _
    $region11: #{model_trans_forward.1} parent=1 // pred_check_branch
      %16 = sbr.rel (0) target = $region13
    $region12: #{model_trans_forward.1} parent=1 // pred_region
      _
    $region13: #{model_trans_forward.1} parent=1 // pred_fallthru
      _
    // Predicated region
    $region14: #{model_trans_forward.1} parent=1 // pred_check
      _
    $region15: #{model_trans_forward.1} parent=1 // pred_check_branch
      %18 = sbr.rel (0) target = $region17
    $region16: #{model_trans_forward.1} parent=1 // pred_region
      _
    $region17: #{model_trans_forward.1} parent=1 // pred_fallthru
      _
    // Predicated region
    $region18: #{model_trans_forward.1} parent=1 // pred_check
      _
    $region19: #{model_trans_forward.1} parent=1 // pred_check_branch
      %20 = sbr.rel (0) target = $region21
    $region20: #{model_trans_forward.1} parent=1 // pred_region
      _
    $region21: #{model_trans_forward.1} parent=1 // pred_fallthru
      _
    %v22 = vld [vmem:[%s1] sm:$0x3f]
    %v23 = vld [vmem:[%s0] sm:$0xff]
    %v24 = vld [vmem:[%s0 + $0x8] sm:$0xff]
    %v25 = vld [vmem:[%s0 + $0x10] sm:$0xff]
    %v26 = vld [vmem:[%s0 + $0x18] sm:$0xff]
    %v27 = vld [vmem:[%s0 + $0x20] sm:$0xff]
    %v28 = vld [vmem:[%s0 + $0x28] sm:$0xff]
    %v29 = vlaneseq
    %v30 = vand.u32 %v29, 127
    %31 = vset.pattern.permute.xlu0 0
    %32 = vperm.xlu0 %31, %v23
    %v33 = vpop.permute.xlu0 %32
    %34 = vset.pattern.permute.xlu0 0
    %35 = vperm.xlu0 %34, %v24
    %v36 = vpop.permute.xlu0 %35
    %37 = vset.pattern.permute.xlu0 0
    %38 = vperm.xlu0 %37, %v25
    %v39 = vpop.permute.xlu0 %38
    %40 = vset.pattern.permute.xlu0 0
    %41 = vperm.xlu0 %40, %v26
    %v42 = vpop.permute.xlu0 %41
    %43 = vset.pattern.permute.xlu0 0
    %44 = vperm.xlu0 %43, %v27
    %v45 = vpop.permute.xlu0 %44
    %46 = vset.pattern.permute.xlu0 0
    %47 = vperm.xlu0 %46, %v28
    %v48 = vpop.permute.xlu0 %47
    %vm49 = vcmp.eq.s32.totalorder %v33, %v30
    %vm50 = vcmp.eq.s32.totalorder %v36, %v30
    %vm51 = vcmp.eq.s32.totalorder %v39, %v30
    %vm52 = vcmp.eq.s32.totalorder %v42, %v30
    %vm53 = vcmp.eq.s32.totalorder %v45, %v30
    %vm54 = vcmp.eq.s32.totalorder %v48, %v30
    %v55 = vsel %vm49, 1, 0
    %v56 = vsel %vm50, 1, 0
    %v57 = vsel %vm51, 1, 0
    %v58 = vsel %vm52, 1, 0
    %v59 = vsel %vm53, 1, 0
    %v60 = vsel %vm54, 1, 0
    %v61 = vcvt.s32.f32 %v55
    %v62 = vcvt.s32.f32 %v56
    %v63 = vcvt.s32.f32 %v57
    %v64 = vcvt.s32.f32 %v58
    %v65 = vcvt.s32.f32 %v59
    %v66 = vcvt.s32.f32 %v60
    %v67 = vld [vmem:[%s3] sm:$0xff]
    %v68 = vld [vmem:[%s3 + $0x8] sm:$0xff]
    %v69 = vld [vmem:[%s3 + $0x10] sm:$0xff]
    %v70 = vld [vmem:[%s3 + $0x18] sm:$0xff]
    %v71 = vld [vmem:[%s3 + $0x20] sm:$0xff]
    %v72 = vld [vmem:[%s3 + $0x28] sm:$0xff]
    %v73 = vld [vmem:[%s3 + $0x30] sm:$0xff]
    %v74 = vld [vmem:[%s3 + $0x38] sm:$0xff]
    %vm75 = vcmask 523264
    %v77 = vsel %vm75, %v61, 0
    %v80 = vsel %vm75, %v62, 0
    %v83 = vsel %vm75, %v63, 0
    %v86 = vsel %vm75, %v64, 0
    %v89 = vsel %vm75, %v65, 0
    %v92 = vsel %vm75, %v66, 0
    %94 = vmatprep.subr.mxu0 0.0
    %95 = vmatpush1.msra.mxu0 0.0
    %96 = vmatprep.subr.mxu0 0.0
    %97 = vmatpush1.msra.mxu0 0.0
    %98 = vmatprep.subr.mxu0 0.0
    %99 = vmatpush1.msra.mxu0 0.0
    %100 = vmatprep.subr.mxu0 0.0
    %101 = vmatpush1.msra.mxu0 0.0
    %102 = vmatprep.subr.mxu0 0.0
    %103 = vmatpush1.msra.mxu0 0.0
    %104 = vmatprep.subr.mxu0 0.0
    %105 = vmatpush1.msra.mxu0 0.0
    %106 = vmatprep.subr.mxu0 0.0
    %107 = vmatpush1.msra.mxu0 0.0
    %108 = vmatprep.subr.mxu0 0.0
    %109 = vmatpush1.msra.mxu0 0.0
    %110 = vmatprep.subr.mxu0 0.0
    %111 = vmatpush1.msra.mxu0 %v74
    %112 = vmatprep.subr.mxu0 0.0
    %113 = vmatpush1.msra.mxu0 %v73
    %114 = vmatprep.subr.mxu0 0.0
    %115 = vmatpush1.msra.mxu0 %v72
    %116 = vmatprep.subr.mxu0 0.0
    %117 = vmatpush1.msra.mxu0 %v71
    %118 = vmatprep.subr.mxu0 0.0
    %119 = vmatpush1.msra.mxu0 %v70
    %120 = vmatprep.subr.mxu0 0.0
    %121 = vmatpush1.msra.mxu0 %v69
    %122 = vmatprep.subr.mxu0 0.0
    %123 = vmatpush1.msra.mxu0 %v68
    %124 = vmatprep.subr.mxu0 0.0
    %125 = vmatpush1.msra.mxu0 %v67
    %126 = vmatprep.subr.mxu0 0.0
    %127 = vmatpush2.msra.mxu0 0.0
    %128 = vmatprep.subr.mxu0 0.0
    %129 = vmatpush2.msra.mxu0 0.0
    %130 = vmatprep.subr.mxu0 0.0
    %131 = vmatpush2.msra.mxu0 0.0
    %132 = vmatprep.subr.mxu0 0.0
    %133 = vmatpush2.msra.mxu0 0.0
    %134 = vmatprep.subr.mxu0 0.0
    %135 = vmatpush2.msra.mxu0 0.0
    %136 = vmatprep.subr.mxu0 0.0
    %137 = vmatpush2.msra.mxu0 0.0
    %138 = vmatprep.subr.mxu0 0.0
    %139 = vmatpush2.msra.mxu0 0.0
    %140 = vmatprep.subr.mxu0 0.0
    %141 = vmatpush2.msra.mxu0 0.0
    %142 = vmatprep.subr.mxu0 0.0
    %143 = vmatpush2.msra.mxu0 0.0
    %144 = vmatprep.subr.mxu0 0.0
    %145 = vmatpush2.msra.mxu0 0.0
    %146 = vmatprep.subr.mxu0 0.0
    %147 = vmatpush2.msra.mxu0 0.0
    %148 = vmatprep.subr.mxu0 0.0
    %149 = vmatpush2.msra.mxu0 0.0
    %150 = vmatprep.subr.mxu0 0.0
    %151 = vmatpush2.msra.mxu0 0.0
    %152 = vmatprep.subr.mxu0 0.0
    %153 = vmatpush2.msra.mxu0 0.0
    %154 = vmatprep.subr.mxu0 0.0
    %155 = vmatpush2.msra.mxu0 0.0
    %156 = vmatprep.subr.mxu0 0.0
    %157 = vmatpush2.msra.mxu0 0.0
    %158 = vmatprep.mubr.f32.mxu0 0.0
    %159 = vmatmul.mubr.f32.gmra.mxu0 %v77
    %v160 = vpop.f32.mrf.mxu0
    %v161 = vadd.f32 0.0, %v160
    %v162 = vpop.f32.mrf.mxu0
    %163 = vmatprep.mubr.f32.mxu0 0.0
    %164 = vmatmul.mubr.f32.gmra.mxu0 %v80
    %v165 = vpop.f32.mrf.mxu0
    %v166 = vadd.f32 0.0, %v165
    %v167 = vpop.f32.mrf.mxu0
    %168 = vmatprep.mubr.f32.mxu0 0.0
    %169 = vmatmul.mubr.f32.gmra.mxu0 %v83
    %v170 = vpop.f32.mrf.mxu0
    %v171 = vadd.f32 0.0, %v170
    %v172 = vpop.f32.mrf.mxu0
    %173 = vmatprep.mubr.f32.mxu0 0.0
    %174 = vmatmul.mubr.f32.gmra.mxu0 %v86
    %v175 = vpop.f32.mrf.mxu0
    %v176 = vadd.f32 0.0, %v175
    %v177 = vpop.f32.mrf.mxu0
    %178 = vmatprep.mubr.f32.mxu0 0.0
    %179 = vmatmul.mubr.f32.gmra.mxu0 %v89
    %v180 = vpop.f32.mrf.mxu0
    %v181 = vadd.f32 0.0, %v180
    %v182 = vpop.f32.mrf.mxu0
    %183 = vmatprep.mubr.f32.mxu0 0.0
    %184 = vmatmul.mubr.f32.gmra.mxu0 %v92
    %v185 = vpop.f32.mrf.mxu0
    %v186 = vadd.f32 0.0, %v185
    %v187 = vpop.f32.mrf.mxu0
    %188 = vdwg.mxu0
    %v189 = vld [vmem:[%s3 + $0x40] sm:$0xff]
    %v190 = vadd.f32 %v161, %v189
    %v191 = vadd.f32 %v166, %v189
    %v192 = vadd.f32 %v171, %v189
    %v193 = vadd.f32 %v176, %v189
    %v194 = vadd.f32 %v181, %v189
    %v195 = vadd.f32 %v186, %v189
    %v196 = vld [vmem:[%s4 + $0x1] sm:$0x1]
    %vm197 = vcmask 261120
    %v198 = vsel %vm197, %v190, 0.0
    %199 = vadd.xlane.f32.xlu0 %v198
    %v200 = vpop.xlane.xlu0 %199
    %v201 = vsel %vm197, %v191, 0.0
    %202 = vadd.xlane.f32.xlu0 %v201
    %v203 = vpop.xlane.xlu0 %202
    %v204 = vsel %vm197, %v192, 0.0
    %205 = vadd.xlane.f32.xlu0 %v204
    %v206 = vpop.xlane.xlu0 %205
    %v207 = vsel %vm197, %v193, 0.0
    %208 = vadd.xlane.f32.xlu0 %v207
    %v209 = vpop.xlane.xlu0 %208
    %v210 = vsel %vm197, %v194, 0.0
    %211 = vadd.xlane.f32.xlu0 %v210
    %v212 = vpop.xlane.xlu0 %211
    %v213 = vsel %vm197, %v195, 0.0
    %214 = vadd.xlane.f32.xlu0 %v213
    %v215 = vpop.xlane.xlu0 %214
    %v216 = vrcp.pop 32.0
    %v217 = vmul.f32 %v200, %v216
    %v218 = vmul.f32 %v203, %v216
    %v219 = vmul.f32 %v206, %v216
    %v220 = vmul.f32 %v209, %v216
    %v221 = vmul.f32 %v212, %v216
    %v222 = vmul.f32 %v215, %v216
    %v223 = vsub.f32 %v190, %v217
    %v224 = vsub.f32 %v191, %v218
    %v225 = vsub.f32 %v192, %v219
    %v226 = vsub.f32 %v193, %v220
    %v227 = vsub.f32 %v194, %v221
    %v228 = vsub.f32 %v195, %v222
    %v229 = vmul.f32 %v223, %v223
    %v230 = vmul.f32 %v224, %v224
    %v231 = vmul.f32 %v225, %v225
    %v232 = vmul.f32 %v226, %v226
    %v233 = vmul.f32 %v227, %v227
    %v234 = vmul.f32 %v228, %v228
    %v235 = vsel %vm197, %v229, 0.0
    %236 = vadd.xlane.f32.xlu0 %v235
    %v237 = vpop.xlane.xlu0 %236
    %v238 = vsel %vm197, %v230, 0.0
    %239 = vadd.xlane.f32.xlu0 %v238
    %v240 = vpop.xlane.xlu0 %239
    %v241 = vsel %vm197, %v231, 0.0
    %242 = vadd.xlane.f32.xlu0 %v241
    %v243 = vpop.xlane.xlu0 %242
    %v244 = vsel %vm197, %v232, 0.0
    %245 = vadd.xlane.f32.xlu0 %v244
    %v246 = vpop.xlane.xlu0 %245
    %v247 = vsel %vm197, %v233, 0.0
    %248 = vadd.xlane.f32.xlu0 %v247
    %v249 = vpop.xlane.xlu0 %248
    %v250 = vsel %vm197, %v234, 0.0
    %251 = vadd.xlane.f32.xlu0 %v250
    %v252 = vpop.xlane.xlu0 %251
    %v253 = vmul.f32 %v237, %v216
    %v254 = vmul.f32 %v240, %v216
    %v255 = vmul.f32 %v243, %v216
    %v256 = vmul.f32 %v246, %v216
    %v257 = vmul.f32 %v249, %v216
    %v258 = vmul.f32 %v252, %v216
    %v259 = vadd.f32 %v253, 1e-12
    %v260 = vadd.f32 %v254, 1e-12
    %v261 = vadd.f32 %v255, 1e-12
    %v262 = vadd.f32 %v256, 1e-12
    %v263 = vadd.f32 %v257, 1e-12
    %v264 = vadd.f32 %v258, 1e-12
    %v265 = vrsqrt.pop %v259
    %v266 = vrsqrt.pop %v260
    %v267 = vrsqrt.pop %v261
    %v268 = vrsqrt.pop %v262
    %v269 = vrsqrt.pop %v263
    %v270 = vrsqrt.pop %v264
    %v271 = vmul.f32 %v223, %v265
    %v272 = vmul.f32 %v224, %v266
    %v273 = vmul.f32 %v225, %v267
    %v274 = vmul.f32 %v226, %v268
    %v275 = vmul.f32 %v227, %v269
    %v276 = vmul.f32 %v228, %v270
    %v278 = vlaneseq
    %v279 = vshrl.u32 %v278, 7
    %v280 = vsub.s32 0, %v279
    %v281 = vrot.slane %v196, %v280
    %282 = vrot.lane.b32.xlu0 %v281, 96
    %v283 = vpop.permute.xlu0 %282
    %v285 = vmul.f32 %v271, %v283
    %v286 = vmul.f32 %v272, %v283
    %v287 = vmul.f32 %v273, %v283
    %v288 = vmul.f32 %v274, %v283
    %v289 = vmul.f32 %v275, %v283
    %v290 = vmul.f32 %v276, %v283
    %291 = vrot.lane.b32.xlu0 %v281, 64
    %v292 = vpop.permute.xlu0 %291
    %v294 = vadd.f32 %v285, %v292
    %v295 = vadd.f32 %v286, %v292
    %v296 = vadd.f32 %v287, %v292
    %v297 = vadd.f32 %v288, %v292
    %v298 = vadd.f32 %v289, %v292
    %v299 = vadd.f32 %v290, %v292
    %v300 = vpack.c.bf16 %v295, %v294
    %v301 = vpack.c.bf16 %v297, %v296
    %v302 = vpack.c.bf16 %v299, %v298
    %v303 = vld [vmem:[%s2] sm:$0xf]
    %v304 = vld [vmem:[%s2 + $0x14] sm:$0xf]
    %v305 = vld [vmem:[%s2 + $0x28] sm:$0xf]
    %v306 = vld [vmem:[%s2 + $0x3c] sm:$0xf]
    %v307 = vld [vmem:[%s4] sm:$0x1]
    %v309 = vlaneseq
    %v310 = vshrl.u32 %v309, 7
    %v311 = vsub.s32 0, %v310
    %v312 = vrot.slane %v307, %v311
    %v318 = vunpack.c.l.b16 %v303
    %v319 = vunpack.c.l.b16 %v304
    %v320 = vunpack.c.l.b16 %v305
    %v321 = vunpack.c.l.b16 %v306
    %v322 = vpack.c.b16 %v319, %v318
    %v323 = vpack.c.b16 %v321, %v320
    %v327 = vsel %vm197, %v300, 0
    %v330 = vsel %vm197, %v301, 0
    %v333 = vsel %vm197, %v302, 0
    %335 = vmatprep.subr.bf16.mxu0 0
    %336 = vmatpush1.bf16.msra.mxu0 0
    %337 = vmatprep.subr.bf16.mxu0 0
    %338 = vmatpush1.bf16.msra.mxu0 0
    %339 = vmatprep.subr.bf16.mxu0 0
    %340 = vmatpush1.bf16.msra.mxu0 0
    %341 = vmatprep.subr.bf16.mxu0 0
    %342 = vmatpush1.bf16.msra.mxu0 0
    %343 = vmatprep.subr.bf16.mxu0 0
    %344 = vmatpush1.bf16.msra.mxu0 0
    %345 = vmatprep.subr.bf16.mxu0 0
    %346 = vmatpush1.bf16.msra.mxu0 0
    %347 = vmatprep.subr.bf16.mxu0 0
    %348 = vmatpush1.bf16.msra.mxu0 %v323
    %349 = vmatprep.subr.bf16.mxu0 0
    %350 = vmatpush1.bf16.msra.mxu0 %v322
    %351 = vmatprep.subr.bf16.mxu0 0
    %352 = vmatpush2.bf16.msra.mxu0 0
    %353 = vmatprep.subr.bf16.mxu0 0
    %354 = vmatpush2.bf16.msra.mxu0 0
    %355 = vmatprep.subr.bf16.mxu0 0
    %356 = vmatpush2.bf16.msra.mxu0 0
    %357 = vmatprep.subr.bf16.mxu0 0
    %358 = vmatpush2.bf16.msra.mxu0 0
    %359 = vmatprep.subr.bf16.mxu0 0
    %360 = vmatpush2.bf16.msra.mxu0 0
    %361 = vmatprep.subr.bf16.mxu0 0
    %362 = vmatpush2.bf16.msra.mxu0 0
    %363 = vmatprep.subr.bf16.mxu0 0
    %364 = vmatpush2.bf16.msra.mxu0 0
    %365 = vmatprep.subr.bf16.mxu0 0
    %366 = vmatpush2.bf16.msra.mxu0 0
    %367 = vmatprep.mubr.bf16.mxu0 0
    %368 = vmatmul.mubr.bf16.gmra.mxu0 %v327
    %v369 = vpop.f32.mrf.mxu0
    %v370 = vadd.f32 %v312, %v369
    %v371 = vpop.f32.mrf.mxu0
    %v372 = vpop.f32.mrf.mxu0
    %v373 = vadd.f32 %v312, %v372
    %v374 = vpop.f32.mrf.mxu0
    %375 = vmatprep.mubr.bf16.mxu0 0
    %376 = vmatmul.mubr.bf16.gmra.mxu0 %v330
    %v377 = vpop.f32.mrf.mxu0
    %v378 = vadd.f32 %v312, %v377
    %v379 = vpop.f32.mrf.mxu0
    %v380 = vpop.f32.mrf.mxu0
    %v381 = vadd.f32 %v312, %v380
    %v382 = vpop.f32.mrf.mxu0
    %383 = vmatprep.mubr.bf16.mxu0 0
    %384 = vmatmul.mubr.bf16.gmra.mxu0 %v333
    %v385 = vpop.f32.mrf.mxu0
    %v386 = vadd.f32 %v312, %v385
    %v387 = vpop.f32.mrf.mxu0
    %v388 = vpop.f32.mrf.mxu0
    %v389 = vadd.f32 %v312, %v388
    %v390 = vpop.f32.mrf.mxu0
    %391 = vdwg.mxu0
    %v392 = vmul.f32 %v370, 0.35355338
    %v393 = vmul.f32 %v373, 0.35355338
    %v394 = vmul.f32 %v378, 0.35355338
    %v395 = vmul.f32 %v381, 0.35355338
    %v396 = vmul.f32 %v386, 0.35355338
    %v397 = vmul.f32 %v389, 0.35355338
    %v398 = vld [vmem:[%s3 + $0x88] sm:$0xff]
    %v399 = vld [vmem:[%s3 + $0x90] sm:$0xff]
    %v400 = vld [vmem:[%s3 + $0x98] sm:$0xff]
    %v401 = vld [vmem:[%s3 + $0xa0] sm:$0xff]
    %v402 = vld [vmem:[%s3 + $0xa8] sm:$0xff]
    %v403 = vld [vmem:[%s3 + $0xb0] sm:$0xff]
    %v404 = vld [vmem:[%s3 + $0xb8] sm:$0xff]
    %v405 = vld [vmem:[%s3 + $0xc0] sm:$0xff]
    %v406 = vlaneseq
    %v407 = vshrl.u32 %v406, 7
    %v408 = vsub.s32 0, %v407
    %v409 = vrot.slane %v392, %v408
    %v410 = vlaneseq
    %v411 = vshrl.u32 %v410, 7
    %v412 = vsub.s32 0, %v411
    %v413 = vrot.slane %v393, %v412
    %v414 = vlaneseq
    %v415 = vshrl.u32 %v414, 7
    %v416 = vsub.s32 0, %v415
    %v417 = vrot.slane %v394, %v416
    %v418 = vlaneseq
    %v419 = vshrl.u32 %v418, 7
    %v420 = vsub.s32 0, %v419
    %v421 = vrot.slane %v395, %v420
    %v422 = vlaneseq
    %v423 = vshrl.u32 %v422, 7
    %v424 = vsub.s32 0, %v423
    %v425 = vrot.slane %v396, %v424
    %v426 = vlaneseq
    %v427 = vshrl.u32 %v426, 7
    %v428 = vsub.s32 0, %v427
    %v429 = vrot.slane %v397, %v428
    %436 = vrot.lane.b32.xlu0 %v370, 96
    %v437 = vpop.permute.xlu0 %436
    %438 = vrot.lane.b32.xlu0 %v373, 96
    %v439 = vpop.permute.xlu0 %438
    %440 = vrot.lane.b32.xlu0 %v378, 96
    %v441 = vpop.permute.xlu0 %440
    %442 = vrot.lane.b32.xlu0 %v381, 96
    %v443 = vpop.permute.xlu0 %442
    %444 = vrot.lane.b32.xlu0 %v386, 96
    %v445 = vpop.permute.xlu0 %444
    %446 = vrot.lane.b32.xlu0 %v389, 96
    %v447 = vpop.permute.xlu0 %446
    %v454 = vmul.f32 %v409, %v437
    %v455 = vmul.f32 %v413, %v439
    %v456 = vmul.f32 %v417, %v441
    %v457 = vmul.f32 %v421, %v443
    %v458 = vmul.f32 %v425, %v445
    %v459 = vmul.f32 %v429, %v447
    %v461 = vsel %vm197, %v454, 0
    %v464 = vsel %vm197, %v455, 0
    %v467 = vsel %vm197, %v456, 0
    %v470 = vsel %vm197, %v457, 0
    %v473 = vsel %vm197, %v458, 0
    %v476 = vsel %vm197, %v459, 0
    %478 = vmatprep.subr.mxu0 0.0
    %479 = vmatpush1.msra.mxu0 0.0
    %480 = vmatprep.subr.mxu0 0.0
    %481 = vmatpush1.msra.mxu0 0.0
    %482 = vmatprep.subr.mxu0 0.0
    %483 = vmatpush1.msra.mxu0 0.0
    %484 = vmatprep.subr.mxu0 0.0
    %485 = vmatpush1.msra.mxu0 0.0
    %486 = vmatprep.subr.mxu0 0.0
    %487 = vmatpush1.msra.mxu0 0.0
    %488 = vmatprep.subr.mxu0 0.0
    %489 = vmatpush1.msra.mxu0 0.0
    %490 = vmatprep.subr.mxu0 0.0
    %491 = vmatpush1.msra.mxu0 0.0
    %492 = vmatprep.subr.mxu0 0.0
    %493 = vmatpush1.msra.mxu0 0.0
    %494 = vmatprep.subr.mxu0 0.0
    %495 = vmatpush1.msra.mxu0 0.0
    %496 = vmatprep.subr.mxu0 0.0
    %497 = vmatpush1.msra.mxu0 0.0
    %498 = vmatprep.subr.mxu0 0.0
    %499 = vmatpush1.msra.mxu0 0.0
    %500 = vmatprep.subr.mxu0 0.0
    %501 = vmatpush1.msra.mxu0 0.0
    %502 = vmatprep.subr.mxu0 0.0
    %503 = vmatpush1.msra.mxu0 %v401
    %504 = vmatprep.subr.mxu0 0.0
    %505 = vmatpush1.msra.mxu0 %v400
    %506 = vmatprep.subr.mxu0 0.0
    %507 = vmatpush1.msra.mxu0 %v399
    %508 = vmatprep.subr.mxu0 0.0
    %509 = vmatpush1.msra.mxu0 %v398
    %510 = vmatprep.subr.mxu0 0.0
    %511 = vmatpush2.msra.mxu0 0.0
    %512 = vmatprep.subr.mxu0 0.0
    %513 = vmatpush2.msra.mxu0 0.0
    %514 = vmatprep.subr.mxu0 0.0
    %515 = vmatpush2.msra.mxu0 0.0
    %516 = vmatprep.subr.mxu0 0.0
    %517 = vmatpush2.msra.mxu0 0.0
    %518 = vmatprep.subr.mxu0 0.0
    %519 = vmatpush2.msra.mxu0 0.0
    %520 = vmatprep.subr.mxu0 0.0
    %521 = vmatpush2.msra.mxu0 0.0
    %522 = vmatprep.subr.mxu0 0.0
    %523 = vmatpush2.msra.mxu0 0.0
    %524 = vmatprep.subr.mxu0 0.0
    %525 = vmatpush2.msra.mxu0 0.0
    %526 = vmatprep.subr.mxu0 0.0
    %527 = vmatpush2.msra.mxu0 0.0
    %528 = vmatprep.subr.mxu0 0.0
    %529 = vmatpush2.msra.mxu0 0.0
    %530 = vmatprep.subr.mxu0 0.0
    %531 = vmatpush2.msra.mxu0 0.0
    %532 = vmatprep.subr.mxu0 0.0
    %533 = vmatpush2.msra.mxu0 0.0
    %534 = vmatprep.subr.mxu0 0.0
    %535 = vmatpush2.msra.mxu0 0.0
    %536 = vmatprep.subr.mxu0 0.0
    %537 = vmatpush2.msra.mxu0 0.0
    %538 = vmatprep.subr.mxu0 0.0
    %539 = vmatpush2.msra.mxu0 0.0
    %540 = vmatprep.subr.mxu0 0.0
    %541 = vmatpush2.msra.mxu0 0.0
    %542 = vmatprep.mubr.f32.mxu0 0.0
    %543 = vmatmul.mubr.f32.gmra.mxu0 %v461
    %v544 = vpop.f32.mrf.mxu0
    %v545 = vadd.f32 0.0, %v544
    %v546 = vpop.f32.mrf.mxu0
    %547 = vmatprep.mubr.f32.mxu0 0.0
    %548 = vmatmul.mubr.f32.gmra.mxu0 %v464
    %v549 = vpop.f32.mrf.mxu0
    %v550 = vadd.f32 0.0, %v549
    %v551 = vpop.f32.mrf.mxu0
    %552 = vmatprep.mubr.f32.mxu0 0.0
    %553 = vmatmul.mubr.f32.gmra.mxu0 %v467
    %v554 = vpop.f32.mrf.mxu0
    %v555 = vadd.f32 0.0, %v554
    %v556 = vpop.f32.mrf.mxu0
    %557 = vmatprep.mubr.f32.mxu0 0.0
    %558 = vmatmul.mubr.f32.gmra.mxu0 %v470
    %v559 = vpop.f32.mrf.mxu0
    %v560 = vadd.f32 0.0, %v559
    %v561 = vpop.f32.mrf.mxu0
    %562 = vmatprep.mubr.f32.mxu0 0.0
    %563 = vmatmul.mubr.f32.gmra.mxu0 %v473
    %v564 = vpop.f32.mrf.mxu0
    %v565 = vadd.f32 0.0, %v564
    %v566 = vpop.f32.mrf.mxu0
    %567 = vmatprep.mubr.f32.mxu0 0.0
    %568 = vmatmul.mubr.f32.gmra.mxu0 %v476
    %v569 = vpop.f32.mrf.mxu0
    %v570 = vadd.f32 0.0, %v569
    %v571 = vpop.f32.mrf.mxu0
    %572 = vdwg.mxu0
    %v573 = vsub.f32 1.0, %v22
    %v574 = vmul.f32 %v573, -1e+09
    %v575 = vlaneseq
    %v576 = vshrl.u32 %v575, 7
    %v577 = vsub.s32 0, %v576
    %v578 = vrot.slane %v574, %v577
    %580 = vbcast.lane.b32.xlu0 %v578, 256
    %v581 = vpop.permute.xlu0 %580
    %v582 = vlaneseq
    %v583 = vshrl.u32 %v582, 7
    %v584 = vsub.s32 1, %v583
    %v585 = vrot.slane %v574, %v584
    %587 = vbcast.lane.b32.xlu0 %v585, 256
    %v588 = vpop.permute.xlu0 %587
    %v589 = vlaneseq
    %v590 = vshrl.u32 %v589, 7
    %v591 = vsub.s32 2, %v590
    %v592 = vrot.slane %v574, %v591
    %594 = vbcast.lane.b32.xlu0 %v592, 256
    %v595 = vpop.permute.xlu0 %594
    %v596 = vlaneseq
    %v597 = vshrl.u32 %v596, 7
    %v598 = vsub.s32 3, %v597
    %v599 = vrot.slane %v574, %v598
    %601 = vbcast.lane.b32.xlu0 %v599, 256
    %v602 = vpop.permute.xlu0 %601
    %v603 = vlaneseq
    %v604 = vshrl.u32 %v603, 7
    %v605 = vsub.s32 4, %v604
    %v606 = vrot.slane %v574, %v605
    %608 = vbcast.lane.b32.xlu0 %v606, 256
    %v609 = vpop.permute.xlu0 %608
    %v610 = vlaneseq
    %v611 = vshrl.u32 %v610, 7
    %v612 = vsub.s32 5, %v611
    %v613 = vrot.slane %v574, %v612
    %615 = vbcast.lane.b32.xlu0 %v613, 256
    %v616 = vpop.permute.xlu0 %615
    %v617 = vadd.f32 %v545, %v581
    %v618 = vadd.f32 %v550, %v588
    %v619 = vadd.f32 %v555, %v595
    %v620 = vadd.f32 %v560, %v602
    %v621 = vadd.f32 %v565, %v609
    %v622 = vadd.f32 %v570, %v616
    %v623 = vsel %vm197, %v617, -inf
    %v624 = vrot.slane %v623, 4
    %v625 = vmax.f32 %v623, %v624
    %v626 = vrot.slane %v625, 2
    %v627 = vmax.f32 %v625, %v626
    %v628 = vrot.slane %v627, 1
    %v629 = vmax.f32 %v627, %v628
    %v630 = vsel %vm197, %v618, -inf
    %v631 = vrot.slane %v630, 4
    %v632 = vmax.f32 %v630, %v631
    %v633 = vrot.slane %v632, 2
    %v634 = vmax.f32 %v632, %v633
    %v635 = vrot.slane %v634, 1
    %v636 = vmax.f32 %v634, %v635
    %v637 = vsel %vm197, %v619, -inf
    %v638 = vrot.slane %v637, 4
    %v639 = vmax.f32 %v637, %v638
    %v640 = vrot.slane %v639, 2
    %v641 = vmax.f32 %v639, %v640
    %v642 = vrot.slane %v641, 1
    %v643 = vmax.f32 %v641, %v642
    %v644 = vsel %vm197, %v620, -inf
    %v645 = vrot.slane %v644, 4
    %v646 = vmax.f32 %v644, %v645
    %v647 = vrot.slane %v646, 2
    %v648 = vmax.f32 %v646, %v647
    %v649 = vrot.slane %v648, 1
    %v650 = vmax.f32 %v648, %v649
    %v651 = vsel %vm197, %v621, -inf
    %v652 = vrot.slane %v651, 4
    %v653 = vmax.f32 %v651, %v652
    %v654 = vrot.slane %v653, 2
    %v655 = vmax.f32 %v653, %v654
    %v656 = vrot.slane %v655, 1
    %v657 = vmax.f32 %v655, %v656
    %v658 = vsel %vm197, %v622, -inf
    %v659 = vrot.slane %v658, 4
    %v660 = vmax.f32 %v658, %v659
    %v661 = vrot.slane %v660, 2
    %v662 = vmax.f32 %v660, %v661
    %v663 = vrot.slane %v662, 1
    %v664 = vmax.f32 %v662, %v663
    %v665 = vsub.f32 %v617, %v629
    %v666 = vsub.f32 %v618, %v636
    %v667 = vsub.f32 %v619, %v643
    %v668 = vsub.f32 %v620, %v650
    %v669 = vsub.f32 %v621, %v657
    %v670 = vsub.f32 %v622, %v664
    %v671 = vmul.f32 %v665, 1.442695
    %v672 = vpow.pop %v671
    %v673 = vmul.f32 %v666, 1.442695
    %v674 = vpow.pop %v673
    %v675 = vmul.f32 %v667, 1.442695
    %v676 = vpow.pop %v675
    %v677 = vmul.f32 %v668, 1.442695
    %v678 = vpow.pop %v677
    %v679 = vmul.f32 %v669, 1.442695
    %v680 = vpow.pop %v679
    %v681 = vmul.f32 %v670, 1.442695
    %v682 = vpow.pop %v681
    %v683 = vsel %vm197, %v672, 0.0
    %v684 = vrot.slane %v683, 4
    %v685 = vadd.f32 %v683, %v684
    %v686 = vrot.slane %v685, 2
    %v687 = vadd.f32 %v685, %v686
    %v688 = vrot.slane %v687, 1
    %v689 = vadd.f32 %v687, %v688
    %v690 = vsel %vm197, %v674, 0.0
    %v691 = vrot.slane %v690, 4
    %v692 = vadd.f32 %v690, %v691
    %v693 = vrot.slane %v692, 2
    %v694 = vadd.f32 %v692, %v693
    %v695 = vrot.slane %v694, 1
    %v696 = vadd.f32 %v694, %v695
    %v697 = vsel %vm197, %v676, 0.0
    %v698 = vrot.slane %v697, 4
    %v699 = vadd.f32 %v697, %v698
    %v700 = vrot.slane %v699, 2
    %v701 = vadd.f32 %v699, %v700
    %v702 = vrot.slane %v701, 1
    %v703 = vadd.f32 %v701, %v702
    %v704 = vsel %vm197, %v678, 0.0
    %v705 = vrot.slane %v704, 4
    %v706 = vadd.f32 %v704, %v705
    %v707 = vrot.slane %v706, 2
    %v708 = vadd.f32 %v706, %v707
    %v709 = vrot.slane %v708, 1
    %v710 = vadd.f32 %v708, %v709
    %v711 = vsel %vm197, %v680, 0.0
    %v712 = vrot.slane %v711, 4
    %v713 = vadd.f32 %v711, %v712
    %v714 = vrot.slane %v713, 2
    %v715 = vadd.f32 %v713, %v714
    %v716 = vrot.slane %v715, 1
    %v717 = vadd.f32 %v715, %v716
    %v718 = vsel %vm197, %v682, 0.0
    %v719 = vrot.slane %v718, 4
    %v720 = vadd.f32 %v718, %v719
    %v721 = vrot.slane %v720, 2
    %v722 = vadd.f32 %v720, %v721
    %v723 = vrot.slane %v722, 1
    %v724 = vadd.f32 %v722, %v723
    %v725 = vrcp.pop %v689
    %v726 = vrcp.pop %v696
    %v727 = vrcp.pop %v703
    %v728 = vrcp.pop %v710
    %v729 = vrcp.pop %v717
    %v730 = vrcp.pop %v724
    %v731 = vmul.f32 %v672, %v725
    %v732 = vmul.f32 %v674, %v726
    %v733 = vmul.f32 %v676, %v727
    %v734 = vmul.f32 %v678, %v728
    %v735 = vmul.f32 %v680, %v729
    %v736 = vmul.f32 %v682, %v730
    %v738 = vsel %vm197, %v731, 0
    %v741 = vsel %vm197, %v732, 0
    %v744 = vsel %vm197, %v733, 0
    %v747 = vsel %vm197, %v734, 0
    %v750 = vsel %vm197, %v735, 0
    %v753 = vsel %vm197, %v736, 0
    %755 = vmatprep.subr.mxu0 0.0
    %756 = vmatpush1.msra.mxu0 0.0
    %757 = vmatprep.subr.mxu0 0.0
    %758 = vmatpush1.msra.mxu0 0.0
    %759 = vmatprep.subr.mxu0 0.0
    %760 = vmatpush1.msra.mxu0 0.0
    %761 = vmatprep.subr.mxu0 0.0
    %762 = vmatpush1.msra.mxu0 0.0
    %763 = vmatprep.subr.mxu0 0.0
    %764 = vmatpush1.msra.mxu0 0.0
    %765 = vmatprep.subr.mxu0 0.0
    %766 = vmatpush1.msra.mxu0 0.0
    %767 = vmatprep.subr.mxu0 0.0
    %768 = vmatpush1.msra.mxu0 0.0
    %769 = vmatprep.subr.mxu0 0.0
    %770 = vmatpush1.msra.mxu0 0.0
    %771 = vmatprep.subr.mxu0 0.0
    %772 = vmatpush1.msra.mxu0 0.0
    %773 = vmatprep.subr.mxu0 0.0
    %774 = vmatpush1.msra.mxu0 0.0
    %775 = vmatprep.subr.mxu0 0.0
    %776 = vmatpush1.msra.mxu0 0.0
    %777 = vmatprep.subr.mxu0 0.0
    %778 = vmatpush1.msra.mxu0 0.0
    %779 = vmatprep.subr.mxu0 0.0
    %780 = vmatpush1.msra.mxu0 %v405
    %781 = vmatprep.subr.mxu0 0.0
    %782 = vmatpush1.msra.mxu0 %v404
    %783 = vmatprep.subr.mxu0 0.0
    %784 = vmatpush1.msra.mxu0 %v403
    %785 = vmatprep.subr.mxu0 0.0
    %786 = vmatpush1.msra.mxu0 %v402
    %787 = vmatprep.subr.mxu0 0.0
    %788 = vmatpush2.msra.mxu0 0.0
    %789 = vmatprep.subr.mxu0 0.0
    %790 = vmatpush2.msra.mxu0 0.0
    %791 = vmatprep.subr.mxu0 0.0
    %792 = vmatpush2.msra.mxu0 0.0
    %793 = vmatprep.subr.mxu0 0.0
    %794 = vmatpush2.msra.mxu0 0.0
    %795 = vmatprep.subr.mxu0 0.0
    %796 = vmatpush2.msra.mxu0 0.0
    %797 = vmatprep.subr.mxu0 0.0
    %798 = vmatpush2.msra.mxu0 0.0
    %799 = vmatprep.subr.mxu0 0.0
    %800 = vmatpush2.msra.mxu0 0.0
    %801 = vmatprep.subr.mxu0 0.0
    %802 = vmatpush2.msra.mxu0 0.0
    %803 = vmatprep.subr.mxu0 0.0
    %804 = vmatpush2.msra.mxu0 0.0
    %805 = vmatprep.subr.mxu0 0.0
    %806 = vmatpush2.msra.mxu0 0.0
    %807 = vmatprep.subr.mxu0 0.0
    %808 = vmatpush2.msra.mxu0 0.0
    %809 = vmatprep.subr.mxu0 0.0
    %810 = vmatpush2.msra.mxu0 0.0
    %811 = vmatprep.subr.mxu0 0.0
    %812 = vmatpush2.msra.mxu0 0.0
    %813 = vmatprep.subr.mxu0 0.0
    %814 = vmatpush2.msra.mxu0 0.0
    %815 = vmatprep.subr.mxu0 0.0
    %816 = vmatpush2.msra.mxu0 0.0
    %817 = vmatprep.subr.mxu0 0.0
    %818 = vmatpush2.msra.mxu0 0.0
    %819 = vmatprep.mubr.f32.mxu0 0.0
    %820 = vmatmul.mubr.f32.gmra.mxu0 %v738
    %v821 = vpop.f32.mrf.mxu0
    %v822 = vadd.f32 0.0, %v821
    %v823 = vpop.f32.mrf.mxu0
    %824 = vmatprep.mubr.f32.mxu0 0.0
    %825 = vmatmul.mubr.f32.gmra.mxu0 %v741
    %v826 = vpop.f32.mrf.mxu0
    %v827 = vadd.f32 0.0, %v826
    %v828 = vpop.f32.mrf.mxu0
    %829 = vmatprep.mubr.f32.mxu0 0.0
    %830 = vmatmul.mubr.f32.gmra.mxu0 %v744
    %v831 = vpop.f32.mrf.mxu0
    %v832 = vadd.f32 0.0, %v831
    %v833 = vpop.f32.mrf.mxu0
    %834 = vmatprep.mubr.f32.mxu0 0.0
    %835 = vmatmul.mubr.f32.gmra.mxu0 %v747
    %v836 = vpop.f32.mrf.mxu0
    %v837 = vadd.f32 0.0, %v836
    %v838 = vpop.f32.mrf.mxu0
    %839 = vmatprep.mubr.f32.mxu0 0.0
    %840 = vmatmul.mubr.f32.gmra.mxu0 %v750
    %v841 = vpop.f32.mrf.mxu0
    %v842 = vadd.f32 0.0, %v841
    %v843 = vpop.f32.mrf.mxu0
    %844 = vmatprep.mubr.f32.mxu0 0.0
    %845 = vmatmul.mubr.f32.gmra.mxu0 %v753
    %v846 = vpop.f32.mrf.mxu0
    %v847 = vadd.f32 0.0, %v846
    %v848 = vpop.f32.mrf.mxu0
    %849 = vdwg.mxu0
    %850 = vrot.lane.b32.xlu0 %v370, 64
    %v851 = vpop.permute.xlu0 %850
    %852 = vrot.lane.b32.xlu0 %v373, 64
    %v853 = vpop.permute.xlu0 %852
    %854 = vrot.lane.b32.xlu0 %v378, 64
    %v855 = vpop.permute.xlu0 %854
    %856 = vrot.lane.b32.xlu0 %v381, 64
    %v857 = vpop.permute.xlu0 %856
    %858 = vrot.lane.b32.xlu0 %v386, 64
    %v859 = vpop.permute.xlu0 %858
    %860 = vrot.lane.b32.xlu0 %v389, 64
    %v861 = vpop.permute.xlu0 %860
    %v868 = vmul.f32 %v822, %v851
    %v869 = vmul.f32 %v827, %v853
    %v870 = vmul.f32 %v832, %v855
    %v871 = vmul.f32 %v837, %v857
    %v872 = vmul.f32 %v842, %v859
    %v873 = vmul.f32 %v847, %v861
    %v874 = vsel %vm197, %v868, 0.0
    %v875 = vrot.slane %v874, 4
    %v876 = vadd.f32 %v874, %v875
    %v877 = vrot.slane %v876, 2
    %v878 = vadd.f32 %v876, %v877
    %v879 = vrot.slane %v878, 1
    %v880 = vadd.f32 %v878, %v879
    %v881 = vsel %vm197, %v869, 0.0
    %v882 = vrot.slane %v881, 4
    %v883 = vadd.f32 %v881, %v882
    %v884 = vrot.slane %v883, 2
    %v885 = vadd.f32 %v883, %v884
    %v886 = vrot.slane %v885, 1
    %v887 = vadd.f32 %v885, %v886
    %v888 = vsel %vm197, %v870, 0.0
    %v889 = vrot.slane %v888, 4
    %v890 = vadd.f32 %v888, %v889
    %v891 = vrot.slane %v890, 2
    %v892 = vadd.f32 %v890, %v891
    %v893 = vrot.slane %v892, 1
    %v894 = vadd.f32 %v892, %v893
    %v895 = vsel %vm197, %v871, 0.0
    %v896 = vrot.slane %v895, 4
    %v897 = vadd.f32 %v895, %v896
    %v898 = vrot.slane %v897, 2
    %v899 = vadd.f32 %v897, %v898
    %v900 = vrot.slane %v899, 1
    %v901 = vadd.f32 %v899, %v900
    %v902 = vsel %vm197, %v872, 0.0
    %v903 = vrot.slane %v902, 4
    %v904 = vadd.f32 %v902, %v903
    %v905 = vrot.slane %v904, 2
    %v906 = vadd.f32 %v904, %v905
    %v907 = vrot.slane %v906, 1
    %v908 = vadd.f32 %v906, %v907
    %v909 = vsel %vm197, %v873, 0.0
    %v910 = vrot.slane %v909, 4
    %v911 = vadd.f32 %v909, %v910
    %v912 = vrot.slane %v911, 2
    %v913 = vadd.f32 %v911, %v912
    %v914 = vrot.slane %v913, 1
    %v915 = vadd.f32 %v913, %v914
    %v916 = vpack.c.bf16 %v880, %v880
    %v917 = vpack.c.bf16 %v887, %v887
    %v918 = vpack.c.bf16 %v894, %v894
    %v919 = vpack.c.bf16 %v901, %v901
    %v920 = vpack.c.bf16 %v908, %v908
    %v921 = vpack.c.bf16 %v915, %v915
    %v928 = vunpack.c.l.b16 %v916
    %v929 = vunpack.c.l.b16 %v917
    %v930 = vunpack.c.l.b16 %v918
    %v931 = vunpack.c.l.b16 %v919
    %v932 = vunpack.c.l.b16 %v920
    %v933 = vunpack.c.l.b16 %v921
    %vm934 = vcmask 1041409
    %v935 = vsel %vm934, %v929, %v928
    %vm936 = vcmask 1042434
    %v937 = vsel %vm936, %v930, %v935
    %vm938 = vcmask 1043459
    %v939 = vsel %vm938, %v931, %v937
    %vm940 = vcmask 1044484
    %v941 = vsel %vm940, %v932, %v939
    %vm942 = vcmask 1045509
    %v943 = vsel %vm942, %v933, %v941
    %v944 = vpack.c.b16 %v943, %v943
    %945 = vrot.lane.b32.xlu0 %v322, 32
    %v946 = vpop.permute.xlu0 %945
    %947 = vrot.lane.b32.xlu0 %v323, 32
    %v948 = vpop.permute.xlu0 %947
    %951 = vrot.lane.b32.xlu0 %v281, 32
    %v952 = vpop.permute.xlu0 %951
    %v955 = vsel %vm197, %v944, 0
    %957 = vmatprep.subr.bf16.mxu0 0
    %958 = vmatpush1.bf16.msra.mxu0 0
    %959 = vmatprep.subr.bf16.mxu0 0
    %960 = vmatpush1.bf16.msra.mxu0 0
    %961 = vmatprep.subr.bf16.mxu0 0
    %962 = vmatpush1.bf16.msra.mxu0 0
    %963 = vmatprep.subr.bf16.mxu0 0
    %964 = vmatpush1.bf16.msra.mxu0 0
    %965 = vmatprep.subr.bf16.mxu0 0
    %966 = vmatpush1.bf16.msra.mxu0 0
    %967 = vmatprep.subr.bf16.mxu0 0
    %968 = vmatpush1.bf16.msra.mxu0 0
    %969 = vmatprep.subr.bf16.mxu0 0
    %970 = vmatpush1.bf16.msra.mxu0 %v948
    %971 = vmatprep.subr.bf16.mxu0 0
    %972 = vmatpush1.bf16.msra.mxu0 %v946
    %973 = vmatprep.subr.bf16.mxu0 0
    %974 = vmatpush2.bf16.msra.mxu0 0
    %975 = vmatprep.subr.bf16.mxu0 0
    %976 = vmatpush2.bf16.msra.mxu0 0
    %977 = vmatprep.subr.bf16.mxu0 0
    %978 = vmatpush2.bf16.msra.mxu0 0
    %979 = vmatprep.subr.bf16.mxu0 0
    %980 = vmatpush2.bf16.msra.mxu0 0
    %981 = vmatprep.subr.bf16.mxu0 0
    %982 = vmatpush2.bf16.msra.mxu0 0
    %983 = vmatprep.subr.bf16.mxu0 0
    %984 = vmatpush2.bf16.msra.mxu0 0
    %985 = vmatprep.subr.bf16.mxu0 0
    %986 = vmatpush2.bf16.msra.mxu0 0
    %987 = vmatprep.subr.bf16.mxu0 0
    %988 = vmatpush2.bf16.msra.mxu0 0
    %989 = vmatprep.mubr.bf16.mxu0 0
    %990 = vmatmul.mubr.bf16.gmra.mxu0 %v955
    %v991 = vpop.f32.mrf.mxu0
    %v992 = vadd.f32 %v952, %v991
    %v993 = vpop.f32.mrf.mxu0
    %v994 = vpop.f32.mrf.mxu0
    %v995 = vpop.f32.mrf.mxu0
    %996 = vdwg.mxu0
    %v998 = vrot.slane %v992, 1
    %v999 = vrot.slane %v992, 2
    %v1000 = vrot.slane %v992, 3
    %v1001 = vrot.slane %v992, 4
    %v1002 = vrot.slane %v992, 5
    %v1009 = vadd.f32 %v294, %v992
    %v1010 = vadd.f32 %v295, %v998
    %v1011 = vadd.f32 %v296, %v999
    %v1012 = vadd.f32 %v297, %v1000
    %v1013 = vadd.f32 %v298, %v1001
    %v1014 = vadd.f32 %v299, %v1002
    %v1015 = vld [vmem:[%s4 + $0x2] sm:$0x1]
    %v1022 = vrot.slane %v1010, 7
    %v1023 = vsel %vm934, %v1022, %v1009
    %v1024 = vrot.slane %v1011, 6
    %v1025 = vsel %vm936, %v1024, %v1023
    %v1026 = vrot.slane %v1012, 5
    %v1027 = vsel %vm938, %v1026, %v1025
    %v1028 = vrot.slane %v1013, 4
    %v1029 = vsel %vm940, %v1028, %v1027
    %v1030 = vrot.slane %v1014, 3
    %v1031 = vsel %vm942, %v1030, %v1029
    %vm1033 = vcmask 259072
    %v1034 = vsel %vm1033, %v1031, 0.0
    %1035 = vadd.xlane.f32.xlu0 %v1034
    %v1036 = vpop.xlane.xlu0 %1035
    %v1037 = vmul.f32 %v1036, %v216
    %v1039 = vrot.slane %v1037, 1
    %v1040 = vrot.slane %v1037, 2
    %v1041 = vrot.slane %v1037, 3
    %v1042 = vrot.slane %v1037, 4
    %v1043 = vrot.slane %v1037, 5
    %v1050 = vsub.f32 %v1009, %v1037
    %v1051 = vsub.f32 %v1010, %v1039
    %v1052 = vsub.f32 %v1011, %v1040
    %v1053 = vsub.f32 %v1012, %v1041
    %v1054 = vsub.f32 %v1013, %v1042
    %v1055 = vsub.f32 %v1014, %v1043
    %v1056 = vmul.f32 %v1050, %v1050
    %v1057 = vmul.f32 %v1051, %v1051
    %v1058 = vmul.f32 %v1052, %v1052
    %v1059 = vmul.f32 %v1053, %v1053
    %v1060 = vmul.f32 %v1054, %v1054
    %v1061 = vmul.f32 %v1055, %v1055
    %v1068 = vrot.slane %v1057, 7
    %v1069 = vsel %vm934, %v1068, %v1056
    %v1070 = vrot.slane %v1058, 6
    %v1071 = vsel %vm936, %v1070, %v1069
    %v1072 = vrot.slane %v1059, 5
    %v1073 = vsel %vm938, %v1072, %v1071
    %v1074 = vrot.slane %v1060, 4
    %v1075 = vsel %vm940, %v1074, %v1073
    %v1076 = vrot.slane %v1061, 3
    %v1077 = vsel %vm942, %v1076, %v1075
    %v1079 = vsel %vm1033, %v1077, 0.0
    %1080 = vadd.xlane.f32.xlu0 %v1079
    %v1081 = vpop.xlane.xlu0 %1080
    %v1082 = vmul.f32 %v1081, %v216
    %v1083 = vadd.f32 %v1082, 1e-12
    %v1084 = vrsqrt.pop %v1083
    %v1086 = vrot.slane %v1084, 1
    %v1087 = vrot.slane %v1084, 2
    %v1088 = vrot.slane %v1084, 3
    %v1089 = vrot.slane %v1084, 4
    %v1090 = vrot.slane %v1084, 5
    %v1097 = vmul.f32 %v1050, %v1084
    %v1098 = vmul.f32 %v1051, %v1086
    %v1099 = vmul.f32 %v1052, %v1087
    %v1100 = vmul.f32 %v1053, %v1088
    %v1101 = vmul.f32 %v1054, %v1089
    %v1102 = vmul.f32 %v1055, %v1090
    %v1104 = vlaneseq
    %v1105 = vshrl.u32 %v1104, 7
    %v1106 = vsub.s32 0, %v1105
    %v1107 = vrot.slane %v1015, %v1106
    %v1109 = vmul.f32 %v1097, %v1107
    %v1110 = vmul.f32 %v1098, %v1107
    %v1111 = vmul.f32 %v1099, %v1107
    %v1112 = vmul.f32 %v1100, %v1107
    %v1113 = vmul.f32 %v1101, %v1107
    %v1114 = vmul.f32 %v1102, %v1107
    %1115 = vrot.lane.b32.xlu0 %v1107, 96
    %v1116 = vpop.permute.xlu0 %1115
    %v1118 = vadd.f32 %v1109, %v1116
    %v1119 = vadd.f32 %v1110, %v1116
    %v1120 = vadd.f32 %v1111, %v1116
    %v1121 = vadd.f32 %v1112, %v1116
    %v1122 = vadd.f32 %v1113, %v1116
    %v1123 = vadd.f32 %v1114, %v1116
    %v1124 = vpack.c.bf16 %v1118, %v1118
    %v1125 = vpack.c.bf16 %v1119, %v1119
    %v1126 = vpack.c.bf16 %v1120, %v1120
    %v1127 = vpack.c.bf16 %v1121, %v1121
    %v1128 = vpack.c.bf16 %v1122, %v1122
    %v1129 = vpack.c.bf16 %v1123, %v1123
    %v1130 = vld [vmem:[%s2 + $0x4] sm:$0xf]
    %v1131 = vld [vmem:[%s2 + $0x18] sm:$0xf]
    %v1132 = vld [vmem:[%s2 + $0x2c] sm:$0xf]
    %v1133 = vld [vmem:[%s2 + $0x40] sm:$0xf]
    %v1134 = vld [vmem:[%s4] sm:$0x3]
    %v1136 = vlaneseq
    %v1137 = vshrl.u32 %v1136, 7
    %v1138 = vsub.s32 0, %v1137
    %v1139 = vrot.slane %v1134, %v1138
    %v1140 = vlaneseq
    %v1141 = vshrl.u32 %v1140, 7
    %v1142 = vsub.s32 1, %v1141
    %v1143 = vrot.slane %v1134, %v1142
    %v1150 = vunpack.c.l.b16 %v1124
    %v1151 = vunpack.c.l.b16 %v1125
    %v1152 = vunpack.c.l.b16 %v1126
    %v1153 = vunpack.c.l.b16 %v1127
    %v1154 = vunpack.c.l.b16 %v1128
    %v1155 = vunpack.c.l.b16 %v1129
    %v1156 = vrot.slane %v1151, 7
    %v1157 = vsel %vm934, %v1156, %v1150
    %v1158 = vrot.slane %v1152, 6
    %v1159 = vsel %vm936, %v1158, %v1157
    %v1160 = vrot.slane %v1153, 5
    %v1161 = vsel %vm938, %v1160, %v1159
    %v1162 = vrot.slane %v1154, 4
    %v1163 = vsel %vm940, %v1162, %v1161
    %v1164 = vrot.slane %v1155, 3
    %v1165 = vsel %vm942, %v1164, %v1163
    %v1166 = vpack.c.b16 %v1165, %v1165
    %v1171 = vunpack.c.l.b16 %v1130
    %v1172 = vunpack.c.l.b16 %v1131
    %v1173 = vunpack.c.l.b16 %v1132
    %v1174 = vunpack.c.l.b16 %v1133
    %v1175 = vpack.c.b16 %v1172, %v1171
    %v1176 = vpack.c.b16 %v1174, %v1173
    %1179 = vrot.lane.b32.xlu0 %v1139, 32
    %v1180 = vpop.permute.xlu0 %1179
    %1181 = vrot.lane.b32.xlu0 %v1143, 32
    %v1182 = vpop.permute.xlu0 %1181
    %v1183 = vsel %vm197, %v1180, %v1182
    %v1186 = vsel %vm197, %v1166, 0
    %1188 = vmatprep.subr.bf16.mxu0 0
    %1189 = vmatpush1.bf16.msra.mxu0 0
    %1190 = vmatprep.subr.bf16.mxu0 0
    %1191 = vmatpush1.bf16.msra.mxu0 0
    %1192 = vmatprep.subr.bf16.mxu0 0
    %1193 = vmatpush1.bf16.msra.mxu0 0
    %1194 = vmatprep.subr.bf16.mxu0 0
    %1195 = vmatpush1.bf16.msra.mxu0 0
    %1196 = vmatprep.subr.bf16.mxu0 0
    %1197 = vmatpush1.bf16.msra.mxu0 0
    %1198 = vmatprep.subr.bf16.mxu0 0
    %1199 = vmatpush1.bf16.msra.mxu0 0
    %1200 = vmatprep.subr.bf16.mxu0 0
    %1201 = vmatpush1.bf16.msra.mxu0 %v1176
    %1202 = vmatprep.subr.bf16.mxu0 0
    %1203 = vmatpush1.bf16.msra.mxu0 %v1175
    %1204 = vmatprep.subr.bf16.mxu0 0
    %1205 = vmatpush2.bf16.msra.mxu0 0
    %1206 = vmatprep.subr.bf16.mxu0 0
    %1207 = vmatpush2.bf16.msra.mxu0 0
    %1208 = vmatprep.subr.bf16.mxu0 0
    %1209 = vmatpush2.bf16.msra.mxu0 0
    %1210 = vmatprep.subr.bf16.mxu0 0
    %1211 = vmatpush2.bf16.msra.mxu0 0
    %1212 = vmatprep.subr.bf16.mxu0 0
    %1213 = vmatpush2.bf16.msra.mxu0 0
    %1214 = vmatprep.subr.bf16.mxu0 0
    %1215 = vmatpush2.bf16.msra.mxu0 0
    %1216 = vmatprep.subr.bf16.mxu0 0
    %1217 = vmatpush2.bf16.msra.mxu0 0
    %1218 = vmatprep.subr.bf16.mxu0 0
    %1219 = vmatpush2.bf16.msra.mxu0 0
    %1220 = vmatprep.mubr.bf16.mxu0 0
    %1221 = vmatmul.mubr.bf16.gmra.mxu0 %v1186
    %v1222 = vpop.f32.mrf.mxu0
    %v1223 = vadd.f32 %v1183, %v1222
    %v1224 = vpop.f32.mrf.mxu0
    %v1225 = vpop.f32.mrf.mxu0
    %v1226 = vpop.f32.mrf.mxu0
    %1227 = vdwg.mxu0
    %v1228 = vmul.f32 %v1223, %v1223
    %v1229 = vmul.f32 %v1223, %v1228
    %v1230 = vmul.f32 %v1229, 0.044715
    %v1231 = vadd.f32 %v1223, %v1230
    %v1232 = vmul.f32 %v1231, 0.7978846
    %v1233 = vtanh.pop %v1232
    %v1234 = vadd.f32 %v1233, 1.0
    %v1235 = vmul.f32 %v1234, 0.5
    %v1236 = vmul.f32 %v1223, %v1235
    %v1237 = vpack.c.bf16 %v1236, %v1236
    %v1238 = vld [vmem:[%s3 + $0x48] sm:$0xff]
    %v1239 = vld [vmem:[%s3 + $0x50] sm:$0xff]
    %v1240 = vld [vmem:[%s3 + $0x58] sm:$0xff]
    %v1241 = vld [vmem:[%s3 + $0x60] sm:$0xff]
    %v1242 = vld [vmem:[%s3 + $0x68] sm:$0xff]
    %v1243 = vld [vmem:[%s3 + $0x70] sm:$0xff]
    %v1244 = vld [vmem:[%s3 + $0x78] sm:$0xff]
    %v1245 = vld [vmem:[%s3 + $0x80] sm:$0xff]
    %v1246 = vpack.c.bf16 %v1239, %v1238
    %v1247 = vpack.c.bf16 %v1241, %v1240
    %v1248 = vpack.c.bf16 %v1243, %v1242
    %v1249 = vpack.c.bf16 %v1245, %v1244
    %1250 = vrot.lane.b32.xlu0 %v1107, 64
    %v1251 = vpop.permute.xlu0 %1250
    %v1254 = vsel %vm75, %v1237, 0
    %1256 = vmatprep.subr.bf16.mxu0 0
    %1257 = vmatpush1.bf16.msra.mxu0 0
    %1258 = vmatprep.subr.bf16.mxu0 0
    %1259 = vmatpush1.bf16.msra.mxu0 0
    %1260 = vmatprep.subr.bf16.mxu0 0
    %1261 = vmatpush1.bf16.msra.mxu0 0
    %1262 = vmatprep.subr.bf16.mxu0 0
    %1263 = vmatpush1.bf16.msra.mxu0 0
    %1264 = vmatprep.subr.bf16.mxu0 0
    %1265 = vmatpush1.bf16.msra.mxu0 %v1249
    %1266 = vmatprep.subr.bf16.mxu0 0
    %1267 = vmatpush1.bf16.msra.mxu0 %v1248
    %1268 = vmatprep.subr.bf16.mxu0 0
    %1269 = vmatpush1.bf16.msra.mxu0 %v1247
    %1270 = vmatprep.subr.bf16.mxu0 0
    %1271 = vmatpush1.bf16.msra.mxu0 %v1246
    %1272 = vmatprep.subr.bf16.mxu0 0
    %1273 = vmatpush2.bf16.msra.mxu0 0
    %1274 = vmatprep.subr.bf16.mxu0 0
    %1275 = vmatpush2.bf16.msra.mxu0 0
    %1276 = vmatprep.subr.bf16.mxu0 0
    %1277 = vmatpush2.bf16.msra.mxu0 0
    %1278 = vmatprep.subr.bf16.mxu0 0
    %1279 = vmatpush2.bf16.msra.mxu0 0
    %1280 = vmatprep.subr.bf16.mxu0 0
    %1281 = vmatpush2.bf16.msra.mxu0 0
    %1282 = vmatprep.subr.bf16.mxu0 0
    %1283 = vmatpush2.bf16.msra.mxu0 0
    %1284 = vmatprep.subr.bf16.mxu0 0
    %1285 = vmatpush2.bf16.msra.mxu0 0
    %1286 = vmatprep.subr.bf16.mxu0 0
    %1287 = vmatpush2.bf16.msra.mxu0 0
    %1288 = vmatprep.mubr.bf16.mxu0 0
    %1289 = vmatmul.mubr.bf16.gmra.mxu0 %v1254
    %v1290 = vpop.f32.mrf.mxu0
    %v1291 = vadd.f32 %v1251, %v1290
    %v1292 = vpop.f32.mrf.mxu0
    %v1293 = vpop.f32.mrf.mxu0
    %v1294 = vpop.f32.mrf.mxu0
    %1295 = vdwg.mxu0
    %v1297 = vrot.slane %v1291, 1
    %v1298 = vrot.slane %v1291, 2
    %v1299 = vrot.slane %v1291, 3
    %v1300 = vrot.slane %v1291, 4
    %v1301 = vrot.slane %v1291, 5
    %v1308 = vadd.f32 %v1118, %v1291
    %v1309 = vadd.f32 %v1119, %v1297
    %v1310 = vadd.f32 %v1120, %v1298
    %v1311 = vadd.f32 %v1121, %v1299
    %v1312 = vadd.f32 %v1122, %v1300
    %v1313 = vadd.f32 %v1123, %v1301
    %v1314 = vld [vmem:[%s4 + $0x3] sm:$0x1]
    %v1321 = vrot.slane %v1309, 7
    %v1322 = vsel %vm934, %v1321, %v1308
    %v1323 = vrot.slane %v1310, 6
    %v1324 = vsel %vm936, %v1323, %v1322
    %v1325 = vrot.slane %v1311, 5
    %v1326 = vsel %vm938, %v1325, %v1324
    %v1327 = vrot.slane %v1312, 4
    %v1328 = vsel %vm940, %v1327, %v1326
    %v1329 = vrot.slane %v1313, 3
    %v1330 = vsel %vm942, %v1329, %v1328
    %v1332 = vsel %vm1033, %v1330, 0.0
    %1333 = vadd.xlane.f32.xlu0 %v1332
    %v1334 = vpop.xlane.xlu0 %1333
    %v1335 = vmul.f32 %v1334, %v216
    %v1337 = vrot.slane %v1335, 1
    %v1338 = vrot.slane %v1335, 2
    %v1339 = vrot.slane %v1335, 3
    %v1340 = vrot.slane %v1335, 4
    %v1341 = vrot.slane %v1335, 5
    %v1348 = vsub.f32 %v1308, %v1335
    %v1349 = vsub.f32 %v1309, %v1337
    %v1350 = vsub.f32 %v1310, %v1338
    %v1351 = vsub.f32 %v1311, %v1339
    %v1352 = vsub.f32 %v1312, %v1340
    %v1353 = vsub.f32 %v1313, %v1341
    %v1354 = vmul.f32 %v1348, %v1348
    %v1355 = vmul.f32 %v1349, %v1349
    %v1356 = vmul.f32 %v1350, %v1350
    %v1357 = vmul.f32 %v1351, %v1351
    %v1358 = vmul.f32 %v1352, %v1352
    %v1359 = vmul.f32 %v1353, %v1353
    %v1366 = vrot.slane %v1355, 7
    %v1367 = vsel %vm934, %v1366, %v1354
    %v1368 = vrot.slane %v1356, 6
    %v1369 = vsel %vm936, %v1368, %v1367
    %v1370 = vrot.slane %v1357, 5
    %v1371 = vsel %vm938, %v1370, %v1369
    %v1372 = vrot.slane %v1358, 4
    %v1373 = vsel %vm940, %v1372, %v1371
    %v1374 = vrot.slane %v1359, 3
    %v1375 = vsel %vm942, %v1374, %v1373
    %v1377 = vsel %vm1033, %v1375, 0.0
    %1378 = vadd.xlane.f32.xlu0 %v1377
    %v1379 = vpop.xlane.xlu0 %1378
    %v1380 = vmul.f32 %v1379, %v216
    %v1381 = vadd.f32 %v1380, 1e-12
    %v1382 = vrsqrt.pop %v1381
    %v1384 = vrot.slane %v1382, 1
    %v1385 = vrot.slane %v1382, 2
    %v1386 = vrot.slane %v1382, 3
    %v1387 = vrot.slane %v1382, 4
    %v1388 = vrot.slane %v1382, 5
    %v1395 = vmul.f32 %v1348, %v1382
    %v1396 = vmul.f32 %v1349, %v1384
    %v1397 = vmul.f32 %v1350, %v1385
    %v1398 = vmul.f32 %v1351, %v1386
    %v1399 = vmul.f32 %v1352, %v1387
    %v1400 = vmul.f32 %v1353, %v1388
    %1401 = vrot.lane.b32.xlu0 %v1107, 32
    %v1402 = vpop.permute.xlu0 %1401
    %v1404 = vmul.f32 %v1395, %v1402
    %v1405 = vmul.f32 %v1396, %v1402
    %v1406 = vmul.f32 %v1397, %v1402
    %v1407 = vmul.f32 %v1398, %v1402
    %v1408 = vmul.f32 %v1399, %v1402
    %v1409 = vmul.f32 %v1400, %v1402
    %v1411 = vlaneseq
    %v1412 = vshrl.u32 %v1411, 7
    %v1413 = vsub.s32 0, %v1412
    %v1414 = vrot.slane %v1314, %v1413
    %v1416 = vadd.f32 %v1404, %v1414
    %v1417 = vadd.f32 %v1405, %v1414
    %v1418 = vadd.f32 %v1406, %v1414
    %v1419 = vadd.f32 %v1407, %v1414
    %v1420 = vadd.f32 %v1408, %v1414
    %v1421 = vadd.f32 %v1409, %v1414
    %v1422 = vpack.c.bf16 %v1416, %v1416
    %v1423 = vpack.c.bf16 %v1417, %v1417
    %v1424 = vpack.c.bf16 %v1418, %v1418
    %v1425 = vpack.c.bf16 %v1419, %v1419
    %v1426 = vpack.c.bf16 %v1420, %v1420
    %v1427 = vpack.c.bf16 %v1421, %v1421
    %v1434 = vunpack.c.l.b16 %v1422
    %v1435 = vunpack.c.l.b16 %v1423
    %v1436 = vunpack.c.l.b16 %v1424
    %v1437 = vunpack.c.l.b16 %v1425
    %v1438 = vunpack.c.l.b16 %v1426
    %v1439 = vunpack.c.l.b16 %v1427
    %v1440 = vrot.slane %v1435, 7
    %v1441 = vsel %vm934, %v1440, %v1434
    %v1442 = vrot.slane %v1436, 6
    %v1443 = vsel %vm936, %v1442, %v1441
    %v1444 = vrot.slane %v1437, 5
    %v1445 = vsel %vm938, %v1444, %v1443
    %v1446 = vrot.slane %v1438, 4
    %v1447 = vsel %vm940, %v1446, %v1445
    %v1448 = vrot.slane %v1439, 3
    %v1449 = vsel %vm942, %v1448, %v1447
    %v1450 = vpack.c.b16 %v1449, %v1449
    %1451 = vrot.lane.b32.xlu0 %v1175, 64
    %v1452 = vpop.permute.xlu0 %1451
    %1453 = vrot.lane.b32.xlu0 %v1176, 64
    %v1454 = vpop.permute.xlu0 %1453
    %1457 = vrot.lane.b32.xlu0 %v1414, 96
    %v1458 = vpop.permute.xlu0 %1457
    %v1461 = vsel %vm197, %v1450, 0
    %1463 = vmatprep.subr.bf16.mxu0 0
    %1464 = vmatpush1.bf16.msra.mxu0 0
    %1465 = vmatprep.subr.bf16.mxu0 0
    %1466 = vmatpush1.bf16.msra.mxu0 0
    %1467 = vmatprep.subr.bf16.mxu0 0
    %1468 = vmatpush1.bf16.msra.mxu0 0
    %1469 = vmatprep.subr.bf16.mxu0 0
    %1470 = vmatpush1.bf16.msra.mxu0 0
    %1471 = vmatprep.subr.bf16.mxu0 0
    %1472 = vmatpush1.bf16.msra.mxu0 0
    %1473 = vmatprep.subr.bf16.mxu0 0
    %1474 = vmatpush1.bf16.msra.mxu0 0
    %1475 = vmatprep.subr.bf16.mxu0 0
    %1476 = vmatpush1.bf16.msra.mxu0 %v1454
    %1477 = vmatprep.subr.bf16.mxu0 0
    %1478 = vmatpush1.bf16.msra.mxu0 %v1452
    %1479 = vmatprep.subr.bf16.mxu0 0
    %1480 = vmatpush2.bf16.msra.mxu0 0
    %1481 = vmatprep.subr.bf16.mxu0 0
    %1482 = vmatpush2.bf16.msra.mxu0 0
    %1483 = vmatprep.subr.bf16.mxu0 0
    %1484 = vmatpush2.bf16.msra.mxu0 0
    %1485 = vmatprep.subr.bf16.mxu0 0
    %1486 = vmatpush2.bf16.msra.mxu0 0
    %1487 = vmatprep.subr.bf16.mxu0 0
    %1488 = vmatpush2.bf16.msra.mxu0 0
    %1489 = vmatprep.subr.bf16.mxu0 0
    %1490 = vmatpush2.bf16.msra.mxu0 0
    %1491 = vmatprep.subr.bf16.mxu0 0
    %1492 = vmatpush2.bf16.msra.mxu0 0
    %1493 = vmatprep.subr.bf16.mxu0 0
    %1494 = vmatpush2.bf16.msra.mxu0 0
    %1495 = vmatprep.mubr.bf16.mxu0 0
    %1496 = vmatmul.mubr.bf16.gmra.mxu0 %v1461
    %v1497 = vpop.f32.mrf.mxu0
    %v1498 = vadd.f32 %v1458, %v1497
    %v1499 = vpop.f32.mrf.mxu0
    %v1500 = vpop.f32.mrf.mxu0
    %v1501 = vpop.f32.mrf.mxu0
    %1502 = vdwg.mxu0
    %v1503 = vtanh.pop %v1498
    %v1505 = vcombine.high %v1503, %v1503
    %v1507 = vunpack.c.l.s4 1983009808
    %v1508 = vunpack.c.0.s8 %v1507
    %v1509 = vlaneseq
    %v1510 = vshrl.u32 %v1509, 7
    %v1511 = vsub.s32 %v1508, %v1510
    %v1512 = vrot.slane %v1503, %v1511
    %v1514 = vunpack.c.l.s4 1983009808
    %v1515 = vunpack.c.0.s8 %v1514
    %v1516 = vlaneseq
    %v1517 = vshrl.u32 %v1516, 7
    %v1518 = vsub.s32 %v1515, %v1517
    %v1519 = vrot.slane %v1505, %v1518
    %v1520 = vcombine.high %v1512, %v1512
    %v1524 = vpack.c.bf16 %v1512, %v1512
    %v1525 = vpack.c.bf16 %v1520, %v1520
    %v1526 = vpack.c.bf16 %v1519, %v1519
    %v1527 = vld [vmem:[%s2 + $0x4] sm:$0xff]
    %v1528 = vld [vmem:[%s2 + $0x18] sm:$0xff]
    %v1529 = vld [vmem:[%s2 + $0x2c] sm:$0xff]
    %v1530 = vld [vmem:[%s2 + $0x40] sm:$0xff]
    %v1531 = vld [vmem:[%s2 + $0x8] sm:$0xff]
    %v1532 = vld [vmem:[%s2 + $0x1c] sm:$0xff]
    %v1533 = vld [vmem:[%s2 + $0x30] sm:$0xff]
    %v1534 = vld [vmem:[%s2 + $0x44] sm:$0xff]
    %v1539 = vunpack.c.l.b16 %v1531
    %v1540 = vunpack.c.h.b16 %v1531
    %v1541 = vunpack.c.l.b16 %v1532
    %v1542 = vunpack.c.h.b16 %v1532
    %v1543 = vunpack.c.l.b16 %v1533
    %v1544 = vunpack.c.h.b16 %v1533
    %v1545 = vunpack.c.l.b16 %v1534
    %v1546 = vunpack.c.h.b16 %v1534
    %v1547 = vpack.c.b16 %v1541, %v1539
    %v1548 = vpack.c.b16 %v1542, %v1540
    %v1549 = vpack.c.b16 %v1545, %v1543
    %v1550 = vpack.c.b16 %v1546, %v1544
    %1551 = vrot.lane.b32.xlu0 %v1547, 32
    %v1552 = vpop.permute.xlu0 %1551
    %1553 = vrot.lane.b32.xlu0 %v1548, 32
    %v1554 = vpop.permute.xlu0 %1553
    %1555 = vrot.lane.b32.xlu0 %v1549, 32
    %v1556 = vpop.permute.xlu0 %1555
    %1557 = vrot.lane.b32.xlu0 %v1550, 32
    %v1558 = vpop.permute.xlu0 %1557
    %vm1559 = vcmask 261120
    %v1560 = vsel %vm1559, %v1552, %v1554
    %v1561 = vsel %vm1559, %v1556, %v1558
    %v1565 = vsel %vm197, %v1525, 0
    %1567 = vmatprep.subr.bf16.mxu0 0
    %1568 = vmatpush1.bf16.msra.mxu0 0
    %1569 = vmatprep.subr.bf16.mxu0 0
    %1570 = vmatpush1.bf16.msra.mxu0 0
    %1571 = vmatprep.subr.bf16.mxu0 0
    %1572 = vmatpush1.bf16.msra.mxu0 0
    %1573 = vmatprep.subr.bf16.mxu0 0
    %1574 = vmatpush1.bf16.msra.mxu0 0
    %1575 = vmatprep.subr.bf16.mxu0 0
    %1576 = vmatpush1.bf16.msra.mxu0 0
    %1577 = vmatprep.subr.bf16.mxu0 0
    %1578 = vmatpush1.bf16.msra.mxu0 0
    %1579 = vmatprep.subr.bf16.mxu0 0
    %1580 = vmatpush1.bf16.msra.mxu0 %v1561
    %1581 = vmatprep.subr.bf16.mxu0 0
    %1582 = vmatpush1.bf16.msra.mxu0 %v1560
    %1583 = vmatprep.subr.bf16.mxu0 0
    %1584 = vmatpush2.bf16.msra.mxu0 0
    %1585 = vmatprep.subr.bf16.mxu0 0
    %1586 = vmatpush2.bf16.msra.mxu0 0
    %1587 = vmatprep.subr.bf16.mxu0 0
    %1588 = vmatpush2.bf16.msra.mxu0 0
    %1589 = vmatprep.subr.bf16.mxu0 0
    %1590 = vmatpush2.bf16.msra.mxu0 0
    %1591 = vmatprep.subr.bf16.mxu0 0
    %1592 = vmatpush2.bf16.msra.mxu0 0
    %1593 = vmatprep.subr.bf16.mxu0 0
    %1594 = vmatpush2.bf16.msra.mxu0 0
    %1595 = vmatprep.subr.bf16.mxu0 0
    %1596 = vmatpush2.bf16.msra.mxu0 0
    %1597 = vmatprep.subr.bf16.mxu0 0
    %1598 = vmatpush2.bf16.msra.mxu0 0
    %1599 = vmatprep.mubr.bf16.mxu0 0
    %1600 = vmatmul.mubr.bf16.gmra.mxu0 %v1565
    %v1601 = vpop.f32.mrf.mxu0
    %v1602 = vadd.f32 0.0, %v1601
    %v1603 = vpop.f32.mrf.mxu0
    %v1604 = vpop.f32.mrf.mxu0
    %v1605 = vpop.f32.mrf.mxu0
    %1606 = vdwg.mxu0
    %v1611 = vunpack.c.l.b16 %v1527
    %v1612 = vunpack.c.h.b16 %v1527
    %v1613 = vunpack.c.l.b16 %v1528
    %v1614 = vunpack.c.h.b16 %v1528
    %v1615 = vunpack.c.l.b16 %v1529
    %v1616 = vunpack.c.h.b16 %v1529
    %v1617 = vunpack.c.l.b16 %v1530
    %v1618 = vunpack.c.h.b16 %v1530
    %v1619 = vpack.c.b16 %v1613, %v1611
    %v1620 = vpack.c.b16 %v1614, %v1612
    %v1621 = vpack.c.b16 %v1617, %v1615
    %v1622 = vpack.c.b16 %v1618, %v1616
    %1623 = vrot.lane.b32.xlu0 %v1619, 32
    %v1624 = vpop.permute.xlu0 %1623
    %1625 = vrot.lane.b32.xlu0 %v1620, 32
    %v1626 = vpop.permute.xlu0 %1625
    %1627 = vrot.lane.b32.xlu0 %v1621, 32
    %v1628 = vpop.permute.xlu0 %1627
    %1629 = vrot.lane.b32.xlu0 %v1622, 32
    %v1630 = vpop.permute.xlu0 %1629
    %v1631 = vsel %vm1559, %v1624, %v1626
    %v1632 = vsel %vm1559, %v1628, %v1630
    %v1636 = vsel %vm197, %v1524, 0
    %1638 = vmatprep.subr.bf16.mxu0 0
    %1639 = vmatpush1.bf16.msra.mxu0 0
    %1640 = vmatprep.subr.bf16.mxu0 0
    %1641 = vmatpush1.bf16.msra.mxu0 0
    %1642 = vmatprep.subr.bf16.mxu0 0
    %1643 = vmatpush1.bf16.msra.mxu0 0
    %1644 = vmatprep.subr.bf16.mxu0 0
    %1645 = vmatpush1.bf16.msra.mxu0 0
    %1646 = vmatprep.subr.bf16.mxu0 0
    %1647 = vmatpush1.bf16.msra.mxu0 0
    %1648 = vmatprep.subr.bf16.mxu0 0
    %1649 = vmatpush1.bf16.msra.mxu0 0
    %1650 = vmatprep.subr.bf16.mxu0 0
    %1651 = vmatpush1.bf16.msra.mxu0 %v1632
    %1652 = vmatprep.subr.bf16.mxu0 0
    %1653 = vmatpush1.bf16.msra.mxu0 %v1631
    %1654 = vmatprep.subr.bf16.mxu0 0
    %1655 = vmatpush2.bf16.msra.mxu0 0
    %1656 = vmatprep.subr.bf16.mxu0 0
    %1657 = vmatpush2.bf16.msra.mxu0 0
    %1658 = vmatprep.subr.bf16.mxu0 0
    %1659 = vmatpush2.bf16.msra.mxu0 0
    %1660 = vmatprep.subr.bf16.mxu0 0
    %1661 = vmatpush2.bf16.msra.mxu0 0
    %1662 = vmatprep.subr.bf16.mxu0 0
    %1663 = vmatpush2.bf16.msra.mxu0 0
    %1664 = vmatprep.subr.bf16.mxu0 0
    %1665 = vmatpush2.bf16.msra.mxu0 0
    %1666 = vmatprep.subr.bf16.mxu0 0
    %1667 = vmatpush2.bf16.msra.mxu0 0
    %1668 = vmatprep.subr.bf16.mxu0 0
    %1669 = vmatpush2.bf16.msra.mxu0 0
    %1670 = vmatprep.mubr.bf16.mxu0 0
    %1671 = vmatmul.mubr.bf16.gmra.mxu0 %v1636
    %v1672 = vpop.f32.mrf.mxu0
    %v1673 = vadd.f32 %v1602, %v1672
    %v1674 = vpop.f32.mrf.mxu0
    %v1675 = vpop.f32.mrf.mxu0
    %v1676 = vpop.f32.mrf.mxu0
    %1677 = vdwg.mxu0
    %v1678 = vld [vmem:[%s2 + $0xc] sm:$0xff]
    %v1679 = vld [vmem:[%s2 + $0x20] sm:$0xff]
    %v1680 = vld [vmem:[%s2 + $0x34] sm:$0xff]
    %v1681 = vld [vmem:[%s2 + $0x48] sm:$0xff]
    %v1686 = vunpack.c.l.b16 %v1678
    %v1687 = vunpack.c.h.b16 %v1678
    %v1688 = vunpack.c.l.b16 %v1679
    %v1689 = vunpack.c.h.b16 %v1679
    %v1690 = vunpack.c.l.b16 %v1680
    %v1691 = vunpack.c.h.b16 %v1680
    %v1692 = vunpack.c.l.b16 %v1681
    %v1693 = vunpack.c.h.b16 %v1681
    %v1694 = vpack.c.b16 %v1688, %v1686
    %v1695 = vpack.c.b16 %v1689, %v1687
    %v1696 = vpack.c.b16 %v1692, %v1690
    %v1697 = vpack.c.b16 %v1693, %v1691
    %1698 = vrot.lane.b32.xlu0 %v1694, 32
    %v1699 = vpop.permute.xlu0 %1698
    %1700 = vrot.lane.b32.xlu0 %v1695, 32
    %v1701 = vpop.permute.xlu0 %1700
    %1702 = vrot.lane.b32.xlu0 %v1696, 32
    %v1703 = vpop.permute.xlu0 %1702
    %1704 = vrot.lane.b32.xlu0 %v1697, 32
    %v1705 = vpop.permute.xlu0 %1704
    %v1706 = vsel %vm1559, %v1699, %v1701
    %v1707 = vsel %vm1559, %v1703, %v1705
    %v1711 = vsel %vm197, %v1526, 0
    %1713 = vmatprep.subr.bf16.mxu0 0
    %1714 = vmatpush1.bf16.msra.mxu0 0
    %1715 = vmatprep.subr.bf16.mxu0 0
    %1716 = vmatpush1.bf16.msra.mxu0 0
    %1717 = vmatprep.subr.bf16.mxu0 0
    %1718 = vmatpush1.bf16.msra.mxu0 0
    %1719 = vmatprep.subr.bf16.mxu0 0
    %1720 = vmatpush1.bf16.msra.mxu0 0
    %1721 = vmatprep.subr.bf16.mxu0 0
    %1722 = vmatpush1.bf16.msra.mxu0 0
    %1723 = vmatprep.subr.bf16.mxu0 0
    %1724 = vmatpush1.bf16.msra.mxu0 0
    %1725 = vmatprep.subr.bf16.mxu0 0
    %1726 = vmatpush1.bf16.msra.mxu0 %v1707
    %1727 = vmatprep.subr.bf16.mxu0 0
    %1728 = vmatpush1.bf16.msra.mxu0 %v1706
    %1729 = vmatprep.subr.bf16.mxu0 0
    %1730 = vmatpush2.bf16.msra.mxu0 0
    %1731 = vmatprep.subr.bf16.mxu0 0
    %1732 = vmatpush2.bf16.msra.mxu0 0
    %1733 = vmatprep.subr.bf16.mxu0 0
    %1734 = vmatpush2.bf16.msra.mxu0 0
    %1735 = vmatprep.subr.bf16.mxu0 0
    %1736 = vmatpush2.bf16.msra.mxu0 0
    %1737 = vmatprep.subr.bf16.mxu0 0
    %1738 = vmatpush2.bf16.msra.mxu0 0
    %1739 = vmatprep.subr.bf16.mxu0 0
    %1740 = vmatpush2.bf16.msra.mxu0 0
    %1741 = vmatprep.subr.bf16.mxu0 0
    %1742 = vmatpush2.bf16.msra.mxu0 0
    %1743 = vmatprep.subr.bf16.mxu0 0
    %1744 = vmatpush2.bf16.msra.mxu0 0
    %1745 = vmatprep.mubr.bf16.mxu0 0
    %1746 = vmatmul.mubr.bf16.gmra.mxu0 %v1711
    %v1747 = vpop.f32.mrf.mxu0
    %v1748 = vadd.f32 0.0, %v1747
    %v1749 = vpop.f32.mrf.mxu0
    %v1750 = vpop.f32.mrf.mxu0
    %v1751 = vpop.f32.mrf.mxu0
    %1752 = vdwg.mxu0
    %v1753 = vadd.f32 %v1673, %v1748
    %v1754 = vld [vmem:[%s4 + $0x3] sm:$0x3]
    %v1756 = vlaneseq
    %v1757 = vshrl.u32 %v1756, 7
    %v1758 = vsub.s32 0, %v1757
    %v1759 = vrot.slane %v1754, %v1758
    %v1760 = vlaneseq
    %v1761 = vshrl.u32 %v1760, 7
    %v1762 = vsub.s32 1, %v1761
    %v1763 = vrot.slane %v1754, %v1762
    %1764 = vrot.lane.b32.xlu0 %v1759, 64
    %v1765 = vpop.permute.xlu0 %1764
    %1766 = vrot.lane.b32.xlu0 %v1763, 64
    %v1767 = vpop.permute.xlu0 %1766
    %v1768 = vsel %vm75, %v1765, %v1767
    %v1770 = vadd.f32 %v1753, %v1768
    %1771 = vst [vmem:[#allocation2] sm:$0x3] %v1770
    // Predicated region
    $region22: #{model_trans_forward.1} parent=1 // pred_check
      _
    $region23: #{model_trans_forward.1} parent=1 // pred_check_branch
      %1773 = sbr.rel (0) target = $region25
    $region24: #{model_trans_forward.1} parent=1 // pred_region
      %s1775 = ssub.s32 32, 32
      %1776 = vsyncadd [#allocation3], %s1775
      %s1778 = sshll.u32 [#allocation2], 4
      %s1779 = int_to_ptr.vmem [resolvable:$true] %s1778
      %1781 = dma.vmem_to_hbm [thread:$0]  %s1779, 32, %s5, [#allocation3]
    $region25: #{model_trans_forward.1} parent=1 // pred_fallthru
      _
    // Predicated region
    $region26: #{model_trans_forward.1} parent=1 // pred_check
      _
    $region27: #{model_trans_forward.1} parent=1 // pred_check_branch
      %1783 = sbr.rel (0) target = $region29
    $region28: #{model_trans_forward.1} parent=1 // pred_region
      %1784 = dma.done [#allocation3], 32
    $region29: #{model_trans_forward.1} parent=1 // pred_fallthru
      _
    %1785 = vsyncpa [#allocation3], 1

</llo_original>
